<compile_context>
chip_gen: v5e
topology: v5e:2x2
jax: 0.10.0
libtpu: 0.0.40
codegen_flags: <defaults>
</compile_context>

<pallas_src>
import functools

import jax
import jax.numpy as jnp
from jax.experimental import pallas as pl
from jax.experimental.pallas import tpu as pltpu


# ----------------------------- kernel helpers ------------------------------

def _layernorm(y, gamma, beta, eps=1e-5):
    # gamma/beta are (1, D) and broadcast over rows; biased variance like torch.
    mean = jnp.mean(y, axis=-1, keepdims=True)
    var = jnp.mean((y - mean) ** 2, axis=-1, keepdims=True)
    return (y - mean) * jax.lax.rsqrt(var + eps) * gamma + beta


# ------------------------- fused transformer block ---------------------------
# One grid step per batch element; each step processes its own (S, E) slice:
#   MHA (fused QKV GEMM with pre-folded scale, per-head softmax, per-head
#   accumulated out-projection) + residual + LN1 + FFN + LN2 + out_proj +
#   residual + LN3.

def ctm_block_kernel(x_ref, wqkvT_ref, bqkv_ref, wo3_ref, bo_ref,
                     g1_ref, be1_ref, w1T_ref, b1_ref, g2_ref, be2_ref,
                     w2T_ref, b2_ref, g3_ref, be3_ref, o_ref, *, num_heads):
    x = x_ref[...].astype(jnp.float32)                    # (S, E)
    S, E = x.shape
    dh = E // num_heads

    # single reads of all small parameter refs (hoisted; no repeated reads /
    # re-materialised implicit broadcasts inside the expressions below).
    wqkvT = wqkvT_ref[...]                                # (E, 3E) bf16
    bqkv = bqkv_ref[...].astype(jnp.float32)              # (1, 3E)
    bo = bo_ref[...].astype(jnp.float32)                  # (1, E)
    g1, be1 = g1_ref[...], be1_ref[...]
    w1T = w1T_ref[...]                                    # (E, M) bf16
    b1 = b1_ref[...].astype(jnp.float32)                  # (1, M)
    g2, be2 = g2_ref[...], be2_ref[...]
    w2T = w2T_ref[...]                                    # (M, E) bf16
    b2 = b2_ref[...].astype(jnp.float32)                  # (1, E)
    g3, be3 = g3_ref[...], be3_ref[...]

    # fused QKV projection: one (S,E) @ (E,3E) GEMM (bf16 operands, f32 acc).
    # 1/sqrt(dh) is already folded into the Q weight/bias block.
    qkv = jnp.dot(x.astype(wqkvT.dtype), wqkvT,
                  preferred_element_type=jnp.float32) + bqkv
    q = qkv[:, 0:E]
    k = qkv[:, E:2 * E]
    v = qkv[:, 2 * E:3 * E]

    # per-head attention; out-projection accumulated per head (no lane-offset
    # concat). wo3_ref is (H, dh, E) -> leading-axis slice, layout-free.
    attn_out = jnp.zeros((S, E), jnp.float32)
    for h in range(num_heads):                            # static unroll (H small)
        sl = slice(h * dh, (h + 1) * dh)
        qh, kh, vh = q[:, sl], k[:, sl], v[:, sl]         # (S, dh) f32
        s = jnp.dot(qh, kh.T, preferred_element_type=jnp.float32)
        s = s - jnp.max(s, axis=-1, keepdims=True)
        p = jnp.exp(s)
        p = p * pl.reciprocal(jnp.sum(p, axis=-1, keepdims=True), approx=True)
        head = jnp.dot(p, vh, preferred_element_type=jnp.float32)   # (S, dh)
        woh = wo3_ref[h]                                  # (dh, E) bf16
        attn_out = attn_out + jnp.dot(head.astype(woh.dtype), woh,
                                      preferred_element_type=jnp.float32)
    attn_out = attn_out + bo

    # residual + LayerNorm1
    x1 = _layernorm(x + attn_out, g1, be1)

    # FFN + LayerNorm2 + out_proj + residual + LayerNorm3 (bf16 GEMM operands)
    h1 = jnp.dot(x1.astype(w1T.dtype), w1T,
                 preferred_element_type=jnp.float32) + b1            # (S, M)
    h1 = _layernorm(h1, g2, be2)
    out = jnp.dot(h1.astype(w2T.dtype), w2T,
                  preferred_element_type=jnp.float32) + b2           # (S, E)
    y = _layernorm(x1 + out, g3, be3)

    o_ref[...] = y.astype(o_ref.dtype)


# ------------------------------- wrapper ------------------------------------

def prepare_params(p, num_heads, compute_dtype=jnp.bfloat16):
    """One-time weight fusion / transposition / scaling / dtype cast."""
    E = p["wq"].shape[0]
    dh = E // num_heads
    scale = 1.0 / float(dh) ** 0.5
    # fold the attention scale into the Q block of the fused QKV weight/bias
    wqkvT = jnp.concatenate([p["wq"].T * scale, p["wk"].T, p["wv"].T], axis=1)
    bqkv = jnp.concatenate([p["bq"] * scale, p["bk"], p["bv"]], axis=1)
    # out_proj weight reshaped per-head: rows h*dh:(h+1)*dh -> wo3[h]
    wo3 = p["wo"].T.reshape(num_heads, dh, E)
    f32 = jnp.float32
    return dict(
        wqkvT=wqkvT.astype(compute_dtype),                # (E, 3E)
        bqkv=bqkv.astype(f32),                            # (1, 3E)
        wo3=wo3.astype(compute_dtype),                    # (H, dh, E)
        bo=p["bo"].astype(f32),
        g1=p["g1"].astype(f32), be1=p["be1"].astype(f32),
        w1T=p["w_ffn1"].T.astype(compute_dtype),          # (E, M)
        b1=p["b_ffn1"].astype(f32),
        g2=p["g2"].astype(f32), be2=p["be2"].astype(f32),
        w2T=p["w_out"].T.astype(compute_dtype),           # (M, E)
        b2=p["b_out"].astype(f32),
        g3=p["g3"].astype(f32), be3=p["be3"].astype(f32),
    )


def ctm_transformer_block(x, prep, num_heads):
    B, S, E = x.shape

    def full_spec(a):
        # full-extent block, constant across the batch grid (copied once)
        return pl.BlockSpec(a.shape, lambda b, _nd=a.ndim: (0,) * _nd)

    in_specs = [
        pl.BlockSpec((None, S, E), lambda b: (b, 0, 0)),  # x: one batch per step
        full_spec(prep["wqkvT"]), full_spec(prep["bqkv"]),
        full_spec(prep["wo3"]), full_spec(prep["bo"]),
        full_spec(prep["g1"]), full_spec(prep["be1"]),
        full_spec(prep["w1T"]), full_spec(prep["b1"]),
        full_spec(prep["g2"]), full_spec(prep["be2"]),
        full_spec(prep["w2T"]), full_spec(prep["b2"]),
        full_spec(prep["g3"]), full_spec(prep["be3"]),
    ]
    out_specs = pl.BlockSpec((None, S, E), lambda b: (b, 0, 0))

    fn = pl.pallas_call(
        functools.partial(ctm_block_kernel, num_heads=num_heads),
        grid=(B,),
        in_specs=in_specs,
        out_specs=out_specs,
        out_shape=jax.ShapeDtypeStruct((B, S, E), x.dtype),
        compiler_params=pltpu.CompilerParams(
            dimension_semantics=("parallel",)),
    )
    return fn(
        x,
        prep["wqkvT"], prep["bqkv"], prep["wo3"], prep["bo"],
        prep["g1"], prep["be1"],
        prep["w1T"], prep["b1"], prep["g2"], prep["be2"],
        prep["w2T"], prep["b2"], prep["g3"], prep["be3"],
    )


# ---------------------------- pure-JAX reference ----------------------------

def reference(x, p, num_heads):
    def ln(y, g, b, eps=1e-5):
        m = jnp.mean(y, -1, keepdims=True)
        v = jnp.mean((y - m) ** 2, -1, keepdims=True)
        return (y - m) / jnp.sqrt(v + eps) * g + b

    B, S, E = x.shape
    dh = E // num_heads
    q = x @ p["wq"].T + p["bq"]
    k = x @ p["wk"].T + p["bk"]
    v = x @ p["wv"].T + p["bv"]
    qh = q.reshape(B, S, num_heads, dh).transpose(0, 2, 1, 3)
    kh = k.reshape(B, S, num_heads, dh).transpose(0, 2, 1, 3)
    vh = v.reshape(B, S, num_heads, dh).transpose(0, 2, 1, 3)
    s = jnp.einsum("bhqd,bhkd->bhqk", qh, kh) / jnp.sqrt(jnp.float32(dh))
    a = jax.nn.softmax(s, -1)
    o = jnp.einsum("bhqk,bhkd->bhqd", a, vh).transpose(0, 2, 1, 3).reshape(B, S, E)
    attn = o @ p["wo"].T + p["bo"]
    x1 = ln(x + attn, p["g1"], p["be1"])
    h = ln(x1 @ p["w_ffn1"].T + p["b_ffn1"], p["g2"], p["be2"])
    out = h @ p["w_out"].T + p["b_out"]
    return ln(x1 + out, p["g3"], p["be3"])


# --------------------------------- main --------------------------------------

if __name__ == "__main__":
    B, S, E, H, M = 2, 8, 32, 4, 64  # batch, seq, embed_dim, num_heads, mlp_dim

    key = jax.random.PRNGKey(0)
    ks = jax.random.split(key, 16)
    f32 = jnp.float32

    params = {
        # MultiheadAttention: in_proj (split into q/k/v) + out_proj
        "wq": 0.05 * jax.random.normal(ks[0], (E, E), f32),
        "wk": 0.05 * jax.random.normal(ks[1], (E, E), f32),
        "wv": 0.05 * jax.random.normal(ks[2], (E, E), f32),
        "bq": 0.01 * jax.random.normal(ks[3], (1, E), f32),
        "bk": 0.01 * jax.random.normal(ks[4], (1, E), f32),
        "bv": 0.01 * jax.random.normal(ks[5], (1, E), f32),
        "wo": 0.05 * jax.random.normal(ks[6], (E, E), f32),
        "bo": 0.01 * jax.random.normal(ks[7], (1, E), f32),
        # LayerNorm1 (embed_dim)
        "g1": jnp.ones((1, E), f32) + 0.02 * jax.random.normal(ks[8], (1, E), f32),
        "be1": 0.01 * jax.random.normal(ks[9], (1, E), f32),
        # FFN Linear(embed_dim -> mlp_dim)
        "w_ffn1": 0.05 * jax.random.normal(ks[10], (M, E), f32),
        "b_ffn1": 0.01 * jax.random.normal(ks[11], (1, M), f32),
        # LayerNorm2 (mlp_dim)
        "g2": jnp.ones((1, M), f32) + 0.02 * jax.random.normal(ks[12], (1, M), f32),
        "be2": 0.01 * jax.random.normal(ks[13], (1, M), f32),
        # out_proj Linear(mlp_dim -> embed_dim)
        "w_out": 0.05 * jax.random.normal(ks[14], (E, M), f32),
        "b_out": 0.01 * jax.random.normal(ks[15], (1, E), f32),
        # LayerNorm3 (embed_dim)
        "g3": jnp.ones((1, E), f32),
        "be3": jnp.zeros((1, E), f32),
    }

    x = jax.random.normal(jax.random.PRNGKey(42), (B, S, E), f32)

    # one-time weight fusion / scaling / bf16 cast (hoisted out of the call path)
    prep = jax.tree_util.tree_map(jax.block_until_ready,
                                  prepare_params(params, num_heads=H))

    out = ctm_transformer_block(x, prep, num_heads=H)
    out = jax.block_until_ready(out)

    ref = reference(x, params, num_heads=H)
    assert out.shape == (B, S, E)
    assert bool(jnp.all(jnp.isfinite(out)))
    # tolerance accounts for bf16 GEMM-operand rounding (weights/activations
    # cast to bf16 for the MXU; accumulation and all elementwise math in f32)
    # plus pl.reciprocal(approx=True) in the softmax denominator.
    assert bool(jnp.allclose(out, ref, atol=2e-2, rtol=2e-2)), "mismatch vs reference"

    print("KERNEL_OK")
</pallas_src>

<mosaic_0001>
module attributes {stable_mosaic.version = 11 : i64} {
  func.func @ctm_block_kernel(%arg0: i32, %arg1: memref<1x8x32xf32, #tpu.memory_space<vmem>>, %arg2: memref<32x96xbf16, #tpu.memory_space<vmem>>, %arg3: memref<1x96xf32, #tpu.memory_space<vmem>>, %arg4: memref<4x8x32xbf16, #tpu.memory_space<vmem>>, %arg5: memref<1x32xf32, #tpu.memory_space<vmem>>, %arg6: memref<1x32xf32, #tpu.memory_space<vmem>>, %arg7: memref<1x32xf32, #tpu.memory_space<vmem>>, %arg8: memref<32x64xbf16, #tpu.memory_space<vmem>>, %arg9: memref<1x64xf32, #tpu.memory_space<vmem>>, %arg10: memref<1x64xf32, #tpu.memory_space<vmem>>, %arg11: memref<1x64xf32, #tpu.memory_space<vmem>>, %arg12: memref<64x32xbf16, #tpu.memory_space<vmem>>, %arg13: memref<1x32xf32, #tpu.memory_space<vmem>>, %arg14: memref<1x32xf32, #tpu.memory_space<vmem>>, %arg15: memref<1x32xf32, #tpu.memory_space<vmem>>, %arg16: memref<1x8x32xf32, #tpu.memory_space<vmem>>) attributes {dimension_semantics = [#tpu.dimension_semantics<parallel>], iteration_bounds = array<i64: 2>, scalar_prefetch = 0 : i64, scratch_operands = 0 : i64, tpu.core_type = #tpu.core_type<tc>, window_params = [{transform_indices = @transform_0, window_bounds = array<i64: 1, 8, 32>}, {pipeline_mode = #tpu.pipeline_mode<synchronous>, transform_indices = @transform_1, window_bounds = array<i64: 32, 96>}, {pipeline_mode = #tpu.pipeline_mode<synchronous>, transform_indices = @transform_2, window_bounds = array<i64: 1, 96>}, {pipeline_mode = #tpu.pipeline_mode<synchronous>, transform_indices = @transform_3, window_bounds = array<i64: 4, 8, 32>}, {pipeline_mode = #tpu.pipeline_mode<synchronous>, transform_indices = @transform_4, window_bounds = array<i64: 1, 32>}, {pipeline_mode = #tpu.pipeline_mode<synchronous>, transform_indices = @transform_5, window_bounds = array<i64: 1, 32>}, {pipeline_mode = #tpu.pipeline_mode<synchronous>, transform_indices = @transform_6, window_bounds = array<i64: 1, 32>}, {pipeline_mode = #tpu.pipeline_mode<synchronous>, transform_indices = @transform_7, window_bounds = array<i64: 32, 64>}, {pipeline_mode = #tpu.pipeline_mode<synchronous>, transform_indices = @transform_8, window_bounds = array<i64: 1, 64>}, {pipeline_mode = #tpu.pipeline_mode<synchronous>, transform_indices = @transform_9, window_bounds = array<i64: 1, 64>}, {pipeline_mode = #tpu.pipeline_mode<synchronous>, transform_indices = @transform_10, window_bounds = array<i64: 1, 64>}, {pipeline_mode = #tpu.pipeline_mode<synchronous>, transform_indices = @transform_11, window_bounds = array<i64: 64, 32>}, {pipeline_mode = #tpu.pipeline_mode<synchronous>, transform_indices = @transform_12, window_bounds = array<i64: 1, 32>}, {pipeline_mode = #tpu.pipeline_mode<synchronous>, transform_indices = @transform_13, window_bounds = array<i64: 1, 32>}, {pipeline_mode = #tpu.pipeline_mode<synchronous>, transform_indices = @transform_14, window_bounds = array<i64: 1, 32>}, {transform_indices = @transform_15, window_bounds = array<i64: 1, 8, 32>}]} {
    %c0 = arith.constant 0 : index
    %c0_0 = arith.constant 0 : index
    %c0_1 = arith.constant 0 : index
    %0 = vector.load %arg1[%c0, %c0_0, %c0_1] : memref<1x8x32xf32, #tpu.memory_space<vmem>>, vector<1x8x32xf32>
    %1 = vector.shape_cast %0 : vector<1x8x32xf32> to vector<8x32xf32>
    %c0_2 = arith.constant 0 : index
    %c0_3 = arith.constant 0 : index
    %2 = vector.load %arg2[%c0_2, %c0_3] : memref<32x96xbf16, #tpu.memory_space<vmem>>, vector<32x96xbf16>
    %c0_4 = arith.constant 0 : index
    %c0_5 = arith.constant 0 : index
    %3 = vector.load %arg3[%c0_4, %c0_5] : memref<1x96xf32, #tpu.memory_space<vmem>>, vector<1x96xf32>
    %c0_6 = arith.constant 0 : index
    %c0_7 = arith.constant 0 : index
    %4 = vector.load %arg5[%c0_6, %c0_7] : memref<1x32xf32, #tpu.memory_space<vmem>>, vector<1x32xf32>
    %c0_8 = arith.constant 0 : index
    %c0_9 = arith.constant 0 : index
    %5 = vector.load %arg6[%c0_8, %c0_9] : memref<1x32xf32, #tpu.memory_space<vmem>>, vector<1x32xf32>
    %c0_10 = arith.constant 0 : index
    %c0_11 = arith.constant 0 : index
    %6 = vector.load %arg7[%c0_10, %c0_11] : memref<1x32xf32, #tpu.memory_space<vmem>>, vector<1x32xf32>
    %c0_12 = arith.constant 0 : index
    %c0_13 = arith.constant 0 : index
    %7 = vector.load %arg8[%c0_12, %c0_13] : memref<32x64xbf16, #tpu.memory_space<vmem>>, vector<32x64xbf16>
    %c0_14 = arith.constant 0 : index
    %c0_15 = arith.constant 0 : index
    %8 = vector.load %arg9[%c0_14, %c0_15] : memref<1x64xf32, #tpu.memory_space<vmem>>, vector<1x64xf32>
    %c0_16 = arith.constant 0 : index
    %c0_17 = arith.constant 0 : index
    %9 = vector.load %arg10[%c0_16, %c0_17] : memref<1x64xf32, #tpu.memory_space<vmem>>, vector<1x64xf32>
    %c0_18 = arith.constant 0 : index
    %c0_19 = arith.constant 0 : index
    %10 = vector.load %arg11[%c0_18, %c0_19] : memref<1x64xf32, #tpu.memory_space<vmem>>, vector<1x64xf32>
    %c0_20 = arith.constant 0 : index
    %c0_21 = arith.constant 0 : index
    %11 = vector.load %arg12[%c0_20, %c0_21] : memref<64x32xbf16, #tpu.memory_space<vmem>>, vector<64x32xbf16>
    %c0_22 = arith.constant 0 : index
    %c0_23 = arith.constant 0 : index
    %12 = vector.load %arg13[%c0_22, %c0_23] : memref<1x32xf32, #tpu.memory_space<vmem>>, vector<1x32xf32>
    %c0_24 = arith.constant 0 : index
    %c0_25 = arith.constant 0 : index
    %13 = vector.load %arg14[%c0_24, %c0_25] : memref<1x32xf32, #tpu.memory_space<vmem>>, vector<1x32xf32>
    %c0_26 = arith.constant 0 : index
    %c0_27 = arith.constant 0 : index
    %14 = vector.load %arg15[%c0_26, %c0_27] : memref<1x32xf32, #tpu.memory_space<vmem>>, vector<1x32xf32>
    %15 = arith.truncf %1 : vector<8x32xf32> to vector<8x32xbf16>
    %cst = arith.constant dense<0.000000e+00> : vector<8x96xf32>
    %16 = tpu.matmul %15, %2, %cst {dimension_numbers = #tpu.dot_dimension_numbers<[1], [0], [0], [1], [0, 0, 1, 1], [], []>} : vector<8x32xbf16>, vector<32x96xbf16>, vector<8x96xf32> -> vector<8x96xf32>
    %17 = vector.broadcast %3 : vector<1x96xf32> to vector<8x96xf32>
    %18 = arith.addf %16, %17 : vector<8x96xf32>
    %19 = vector.extract_strided_slice %18 {offsets = [0, 0], sizes = [8, 32], strides = [1, 1]} : vector<8x96xf32> to vector<8x32xf32>
    %20 = vector.extract_strided_slice %18 {offsets = [0, 32], sizes = [8, 32], strides = [1, 1]} : vector<8x96xf32> to vector<8x32xf32>
    %21 = vector.extract_strided_slice %18 {offsets = [0, 64], sizes = [8, 32], strides = [1, 1]} : vector<8x96xf32> to vector<8x32xf32>
    %cst_28 = arith.constant 0.000000e+00 : f32
    %22 = vector.broadcast %cst_28 : f32 to vector<8x32xf32>
    %23 = vector.extract_strided_slice %19 {offsets = [0, 0], sizes = [8, 8], strides = [1, 1]} : vector<8x32xf32> to vector<8x8xf32>
    %24 = vector.extract_strided_slice %20 {offsets = [0, 0], sizes = [8, 8], strides = [1, 1]} : vector<8x32xf32> to vector<8x8xf32>
    %25 = vector.extract_strided_slice %21 {offsets = [0, 0], sizes = [8, 8], strides = [1, 1]} : vector<8x32xf32> to vector<8x8xf32>
    %26 = tpu.transpose %24, [1, 0] : vector<8x8xf32> -> vector<8x8xf32>
    %cst_29 = arith.constant dense<0.000000e+00> : vector<8x8xf32>
    %27 = tpu.matmul %23, %26, %cst_29 {dimension_numbers = #tpu.dot_dimension_numbers<[1], [0], [0], [1], [0, 0, 1, 1], [], []>} : vector<8x8xf32>, vector<8x8xf32>, vector<8x8xf32> -> vector<8x8xf32>
    %cst_30 = arith.constant dense<0xFF800000> : vector<8xf32>
    %28 = vector.multi_reduction <maximumf>, %27, %cst_30 [1] : vector<8x8xf32> to vector<8xf32>
    %29 = vector.shape_cast %28 : vector<8xf32> to vector<8x1xf32>
    %30 = vector.broadcast %29 : vector<8x1xf32> to vector<8x8xf32>
    %31 = arith.subf %27, %30 : vector<8x8xf32>
    %32 = math.exp %31 : vector<8x8xf32>
    %cst_31 = arith.constant dense<0.000000e+00> : vector<8xf32>
    %33 = vector.multi_reduction <add>, %32, %cst_31 [1] : vector<8x8xf32> to vector<8xf32>
    %34 = vector.shape_cast %33 : vector<8xf32> to vector<8x1xf32>
    %35 = tpu.reciprocal %34 {approx = true} : vector<8x1xf32> -> vector<8x1xf32>
    %36 = vector.broadcast %35 : vector<8x1xf32> to vector<8x8xf32>
    %37 = arith.mulf %32, %36 : vector<8x8xf32>
    %cst_32 = arith.constant dense<0.000000e+00> : vector<8x8xf32>
    %38 = tpu.matmul %37, %25, %cst_32 {dimension_numbers = #tpu.dot_dimension_numbers<[1], [0], [0], [1], [0, 0, 1, 1], [], []>} : vector<8x8xf32>, vector<8x8xf32>, vector<8x8xf32> -> vector<8x8xf32>
    %c0_33 = arith.constant 0 : index
    %c0_34 = arith.constant 0 : index
    %c0_35 = arith.constant 0 : index
    %39 = vector.load %arg4[%c0_33, %c0_34, %c0_35] : memref<4x8x32xbf16, #tpu.memory_space<vmem>>, vector<1x8x32xbf16>
    %40 = vector.shape_cast %39 : vector<1x8x32xbf16> to vector<8x32xbf16>
    %41 = arith.truncf %38 : vector<8x8xf32> to vector<8x8xbf16>
    %cst_36 = arith.constant dense<0.000000e+00> : vector<8x32xf32>
    %42 = tpu.matmul %41, %40, %cst_36 {dimension_numbers = #tpu.dot_dimension_numbers<[1], [0], [0], [1], [0, 0, 1, 1], [], []>} : vector<8x8xbf16>, vector<8x32xbf16>, vector<8x32xf32> -> vector<8x32xf32>
    %43 = arith.addf %22, %42 : vector<8x32xf32>
    %44 = vector.extract_strided_slice %19 {offsets = [0, 8], sizes = [8, 8], strides = [1, 1]} : vector<8x32xf32> to vector<8x8xf32>
    %45 = vector.extract_strided_slice %20 {offsets = [0, 8], sizes = [8, 8], strides = [1, 1]} : vector<8x32xf32> to vector<8x8xf32>
    %46 = vector.extract_strided_slice %21 {offsets = [0, 8], sizes = [8, 8], strides = [1, 1]} : vector<8x32xf32> to vector<8x8xf32>
    %47 = tpu.transpose %45, [1, 0] : vector<8x8xf32> -> vector<8x8xf32>
    %cst_37 = arith.constant dense<0.000000e+00> : vector<8x8xf32>
    %48 = tpu.matmul %44, %47, %cst_37 {dimension_numbers = #tpu.dot_dimension_numbers<[1], [0], [0], [1], [0, 0, 1, 1], [], []>} : vector<8x8xf32>, vector<8x8xf32>, vector<8x8xf32> -> vector<8x8xf32>
    %cst_38 = arith.constant dense<0xFF800000> : vector<8xf32>
    %49 = vector.multi_reduction <maximumf>, %48, %cst_38 [1] : vector<8x8xf32> to vector<8xf32>
    %50 = vector.shape_cast %49 : vector<8xf32> to vector<8x1xf32>
    %51 = vector.broadcast %50 : vector<8x1xf32> to vector<8x8xf32>
    %52 = arith.subf %48, %51 : vector<8x8xf32>
    %53 = math.exp %52 : vector<8x8xf32>
    %cst_39 = arith.constant dense<0.000000e+00> : vector<8xf32>
    %54 = vector.multi_reduction <add>, %53, %cst_39 [1] : vector<8x8xf32> to vector<8xf32>
    %55 = vector.shape_cast %54 : vector<8xf32> to vector<8x1xf32>
    %56 = tpu.reciprocal %55 {approx = true} : vector<8x1xf32> -> vector<8x1xf32>
    %57 = vector.broadcast %56 : vector<8x1xf32> to vector<8x8xf32>
    %58 = arith.mulf %53, %57 : vector<8x8xf32>
    %cst_40 = arith.constant dense<0.000000e+00> : vector<8x8xf32>
    %59 = tpu.matmul %58, %46, %cst_40 {dimension_numbers = #tpu.dot_dimension_numbers<[1], [0], [0], [1], [0, 0, 1, 1], [], []>} : vector<8x8xf32>, vector<8x8xf32>, vector<8x8xf32> -> vector<8x8xf32>
    %c1 = arith.constant 1 : index
    %c0_41 = arith.constant 0 : index
    %c0_42 = arith.constant 0 : index
    %60 = vector.load %arg4[%c1, %c0_41, %c0_42] : memref<4x8x32xbf16, #tpu.memory_space<vmem>>, vector<1x8x32xbf16>
    %61 = vector.shape_cast %60 : vector<1x8x32xbf16> to vector<8x32xbf16>
    %62 = arith.truncf %59 : vector<8x8xf32> to vector<8x8xbf16>
    %cst_43 = arith.constant dense<0.000000e+00> : vector<8x32xf32>
    %63 = tpu.matmul %62, %61, %cst_43 {dimension_numbers = #tpu.dot_dimension_numbers<[1], [0], [0], [1], [0, 0, 1, 1], [], []>} : vector<8x8xbf16>, vector<8x32xbf16>, vector<8x32xf32> -> vector<8x32xf32>
    %64 = arith.addf %43, %63 : vector<8x32xf32>
    %65 = vector.extract_strided_slice %19 {offsets = [0, 16], sizes = [8, 8], strides = [1, 1]} : vector<8x32xf32> to vector<8x8xf32>
    %66 = vector.extract_strided_slice %20 {offsets = [0, 16], sizes = [8, 8], strides = [1, 1]} : vector<8x32xf32> to vector<8x8xf32>
    %67 = vector.extract_strided_slice %21 {offsets = [0, 16], sizes = [8, 8], strides = [1, 1]} : vector<8x32xf32> to vector<8x8xf32>
    %68 = tpu.transpose %66, [1, 0] : vector<8x8xf32> -> vector<8x8xf32>
    %cst_44 = arith.constant dense<0.000000e+00> : vector<8x8xf32>
    %69 = tpu.matmul %65, %68, %cst_44 {dimension_numbers = #tpu.dot_dimension_numbers<[1], [0], [0], [1], [0, 0, 1, 1], [], []>} : vector<8x8xf32>, vector<8x8xf32>, vector<8x8xf32> -> vector<8x8xf32>
    %cst_45 = arith.constant dense<0xFF800000> : vector<8xf32>
    %70 = vector.multi_reduction <maximumf>, %69, %cst_45 [1] : vector<8x8xf32> to vector<8xf32>
    %71 = vector.shape_cast %70 : vector<8xf32> to vector<8x1xf32>
    %72 = vector.broadcast %71 : vector<8x1xf32> to vector<8x8xf32>
    %73 = arith.subf %69, %72 : vector<8x8xf32>
    %74 = math.exp %73 : vector<8x8xf32>
    %cst_46 = arith.constant dense<0.000000e+00> : vector<8xf32>
    %75 = vector.multi_reduction <add>, %74, %cst_46 [1] : vector<8x8xf32> to vector<8xf32>
    %76 = vector.shape_cast %75 : vector<8xf32> to vector<8x1xf32>
    %77 = tpu.reciprocal %76 {approx = true} : vector<8x1xf32> -> vector<8x1xf32>
    %78 = vector.broadcast %77 : vector<8x1xf32> to vector<8x8xf32>
    %79 = arith.mulf %74, %78 : vector<8x8xf32>
    %cst_47 = arith.constant dense<0.000000e+00> : vector<8x8xf32>
    %80 = tpu.matmul %79, %67, %cst_47 {dimension_numbers = #tpu.dot_dimension_numbers<[1], [0], [0], [1], [0, 0, 1, 1], [], []>} : vector<8x8xf32>, vector<8x8xf32>, vector<8x8xf32> -> vector<8x8xf32>
    %c2 = arith.constant 2 : index
    %c0_48 = arith.constant 0 : index
    %c0_49 = arith.constant 0 : index
    %81 = vector.load %arg4[%c2, %c0_48, %c0_49] : memref<4x8x32xbf16, #tpu.memory_space<vmem>>, vector<1x8x32xbf16>
    %82 = vector.shape_cast %81 : vector<1x8x32xbf16> to vector<8x32xbf16>
    %83 = arith.truncf %80 : vector<8x8xf32> to vector<8x8xbf16>
    %cst_50 = arith.constant dense<0.000000e+00> : vector<8x32xf32>
    %84 = tpu.matmul %83, %82, %cst_50 {dimension_numbers = #tpu.dot_dimension_numbers<[1], [0], [0], [1], [0, 0, 1, 1], [], []>} : vector<8x8xbf16>, vector<8x32xbf16>, vector<8x32xf32> -> vector<8x32xf32>
    %85 = arith.addf %64, %84 : vector<8x32xf32>
    %86 = vector.extract_strided_slice %19 {offsets = [0, 24], sizes = [8, 8], strides = [1, 1]} : vector<8x32xf32> to vector<8x8xf32>
    %87 = vector.extract_strided_slice %20 {offsets = [0, 24], sizes = [8, 8], strides = [1, 1]} : vector<8x32xf32> to vector<8x8xf32>
    %88 = vector.extract_strided_slice %21 {offsets = [0, 24], sizes = [8, 8], strides = [1, 1]} : vector<8x32xf32> to vector<8x8xf32>
    %89 = tpu.transpose %87, [1, 0] : vector<8x8xf32> -> vector<8x8xf32>
    %cst_51 = arith.constant dense<0.000000e+00> : vector<8x8xf32>
    %90 = tpu.matmul %86, %89, %cst_51 {dimension_numbers = #tpu.dot_dimension_numbers<[1], [0], [0], [1], [0, 0, 1, 1], [], []>} : vector<8x8xf32>, vector<8x8xf32>, vector<8x8xf32> -> vector<8x8xf32>
    %cst_52 = arith.constant dense<0xFF800000> : vector<8xf32>
    %91 = vector.multi_reduction <maximumf>, %90, %cst_52 [1] : vector<8x8xf32> to vector<8xf32>
    %92 = vector.shape_cast %91 : vector<8xf32> to vector<8x1xf32>
    %93 = vector.broadcast %92 : vector<8x1xf32> to vector<8x8xf32>
    %94 = arith.subf %90, %93 : vector<8x8xf32>
    %95 = math.exp %94 : vector<8x8xf32>
    %cst_53 = arith.constant dense<0.000000e+00> : vector<8xf32>
    %96 = vector.multi_reduction <add>, %95, %cst_53 [1] : vector<8x8xf32> to vector<8xf32>
    %97 = vector.shape_cast %96 : vector<8xf32> to vector<8x1xf32>
    %98 = tpu.reciprocal %97 {approx = true} : vector<8x1xf32> -> vector<8x1xf32>
    %99 = vector.broadcast %98 : vector<8x1xf32> to vector<8x8xf32>
    %100 = arith.mulf %95, %99 : vector<8x8xf32>
    %cst_54 = arith.constant dense<0.000000e+00> : vector<8x8xf32>
    %101 = tpu.matmul %100, %88, %cst_54 {dimension_numbers = #tpu.dot_dimension_numbers<[1], [0], [0], [1], [0, 0, 1, 1], [], []>} : vector<8x8xf32>, vector<8x8xf32>, vector<8x8xf32> -> vector<8x8xf32>
    %c3 = arith.constant 3 : index
    %c0_55 = arith.constant 0 : index
    %c0_56 = arith.constant 0 : index
    %102 = vector.load %arg4[%c3, %c0_55, %c0_56] : memref<4x8x32xbf16, #tpu.memory_space<vmem>>, vector<1x8x32xbf16>
    %103 = vector.shape_cast %102 : vector<1x8x32xbf16> to vector<8x32xbf16>
    %104 = arith.truncf %101 : vector<8x8xf32> to vector<8x8xbf16>
    %cst_57 = arith.constant dense<0.000000e+00> : vector<8x32xf32>
    %105 = tpu.matmul %104, %103, %cst_57 {dimension_numbers = #tpu.dot_dimension_numbers<[1], [0], [0], [1], [0, 0, 1, 1], [], []>} : vector<8x8xbf16>, vector<8x32xbf16>, vector<8x32xf32> -> vector<8x32xf32>
    %106 = arith.addf %85, %105 : vector<8x32xf32>
    %107 = vector.broadcast %4 : vector<1x32xf32> to vector<8x32xf32>
    %108 = arith.addf %106, %107 : vector<8x32xf32>
    %109 = arith.addf %1, %108 : vector<8x32xf32>
    %cst_58 = arith.constant dense<0.000000e+00> : vector<8xf32>
    %110 = vector.multi_reduction <add>, %109, %cst_58 [1] : vector<8x32xf32> to vector<8xf32>
    %111 = vector.shape_cast %110 : vector<8xf32> to vector<8x1xf32>
    %cst_59 = arith.constant 3.200000e+01 : f32
    %112 = vector.broadcast %cst_59 : f32 to vector<8x1xf32>
    %113 = arith.divf %111, %112 : vector<8x1xf32>
    %114 = vector.broadcast %113 : vector<8x1xf32> to vector<8x32xf32>
    %115 = arith.subf %109, %114 : vector<8x32xf32>
    %116 = arith.mulf %115, %115 : vector<8x32xf32>
    %cst_60 = arith.constant dense<0.000000e+00> : vector<8xf32>
    %117 = vector.multi_reduction <add>, %116, %cst_60 [1] : vector<8x32xf32> to vector<8xf32>
    %118 = vector.shape_cast %117 : vector<8xf32> to vector<8x1xf32>
    %cst_61 = arith.constant 3.200000e+01 : f32
    %119 = vector.broadcast %cst_61 : f32 to vector<8x1xf32>
    %120 = arith.divf %118, %119 : vector<8x1xf32>
    %121 = vector.broadcast %113 : vector<8x1xf32> to vector<8x32xf32>
    %122 = arith.subf %109, %121 : vector<8x32xf32>
    %cst_62 = arith.constant 9.99999974E-6 : f32
    %123 = vector.broadcast %cst_62 : f32 to vector<8x1xf32>
    %124 = arith.addf %120, %123 : vector<8x1xf32>
    %125 = math.rsqrt %124 : vector<8x1xf32>
    %126 = vector.broadcast %125 : vector<8x1xf32> to vector<8x32xf32>
    %127 = arith.mulf %122, %126 : vector<8x32xf32>
    %128 = vector.broadcast %5 : vector<1x32xf32> to vector<8x32xf32>
    %129 = arith.mulf %127, %128 : vector<8x32xf32>
    %130 = vector.broadcast %6 : vector<1x32xf32> to vector<8x32xf32>
    %131 = arith.addf %129, %130 : vector<8x32xf32>
    %132 = arith.truncf %131 : vector<8x32xf32> to vector<8x32xbf16>
    %cst_63 = arith.constant dense<0.000000e+00> : vector<8x64xf32>
    %133 = tpu.matmul %132, %7, %cst_63 {dimension_numbers = #tpu.dot_dimension_numbers<[1], [0], [0], [1], [0, 0, 1, 1], [], []>} : vector<8x32xbf16>, vector<32x64xbf16>, vector<8x64xf32> -> vector<8x64xf32>
    %134 = vector.broadcast %8 : vector<1x64xf32> to vector<8x64xf32>
    %135 = arith.addf %133, %134 : vector<8x64xf32>
    %cst_64 = arith.constant dense<0.000000e+00> : vector<8xf32>
    %136 = vector.multi_reduction <add>, %135, %cst_64 [1] : vector<8x64xf32> to vector<8xf32>
    %137 = vector.shape_cast %136 : vector<8xf32> to vector<8x1xf32>
    %cst_65 = arith.constant 6.400000e+01 : f32
    %138 = vector.broadcast %cst_65 : f32 to vector<8x1xf32>
    %139 = arith.divf %137, %138 : vector<8x1xf32>
    %140 = vector.broadcast %139 : vector<8x1xf32> to vector<8x64xf32>
    %141 = arith.subf %135, %140 : vector<8x64xf32>
    %142 = arith.mulf %141, %141 : vector<8x64xf32>
    %cst_66 = arith.constant dense<0.000000e+00> : vector<8xf32>
    %143 = vector.multi_reduction <add>, %142, %cst_66 [1] : vector<8x64xf32> to vector<8xf32>
    %144 = vector.shape_cast %143 : vector<8xf32> to vector<8x1xf32>
    %cst_67 = arith.constant 6.400000e+01 : f32
    %145 = vector.broadcast %cst_67 : f32 to vector<8x1xf32>
    %146 = arith.divf %144, %145 : vector<8x1xf32>
    %147 = vector.broadcast %139 : vector<8x1xf32> to vector<8x64xf32>
    %148 = arith.subf %135, %147 : vector<8x64xf32>
    %cst_68 = arith.constant 9.99999974E-6 : f32
    %149 = vector.broadcast %cst_68 : f32 to vector<8x1xf32>
    %150 = arith.addf %146, %149 : vector<8x1xf32>
    %151 = math.rsqrt %150 : vector<8x1xf32>
    %152 = vector.broadcast %151 : vector<8x1xf32> to vector<8x64xf32>
    %153 = arith.mulf %148, %152 : vector<8x64xf32>
    %154 = vector.broadcast %9 : vector<1x64xf32> to vector<8x64xf32>
    %155 = arith.mulf %153, %154 : vector<8x64xf32>
    %156 = vector.broadcast %10 : vector<1x64xf32> to vector<8x64xf32>
    %157 = arith.addf %155, %156 : vector<8x64xf32>
    %158 = arith.truncf %157 : vector<8x64xf32> to vector<8x64xbf16>
    %cst_69 = arith.constant dense<0.000000e+00> : vector<8x32xf32>
    %159 = tpu.matmul %158, %11, %cst_69 {dimension_numbers = #tpu.dot_dimension_numbers<[1], [0], [0], [1], [0, 0, 1, 1], [], []>} : vector<8x64xbf16>, vector<64x32xbf16>, vector<8x32xf32> -> vector<8x32xf32>
    %160 = vector.broadcast %12 : vector<1x32xf32> to vector<8x32xf32>
    %161 = arith.addf %159, %160 : vector<8x32xf32>
    %162 = arith.addf %131, %161 : vector<8x32xf32>
    %cst_70 = arith.constant dense<0.000000e+00> : vector<8xf32>
    %163 = vector.multi_reduction <add>, %162, %cst_70 [1] : vector<8x32xf32> to vector<8xf32>
    %164 = vector.shape_cast %163 : vector<8xf32> to vector<8x1xf32>
    %cst_71 = arith.constant 3.200000e+01 : f32
    %165 = vector.broadcast %cst_71 : f32 to vector<8x1xf32>
    %166 = arith.divf %164, %165 : vector<8x1xf32>
    %167 = vector.broadcast %166 : vector<8x1xf32> to vector<8x32xf32>
    %168 = arith.subf %162, %167 : vector<8x32xf32>
    %169 = arith.mulf %168, %168 : vector<8x32xf32>
    %cst_72 = arith.constant dense<0.000000e+00> : vector<8xf32>
    %170 = vector.multi_reduction <add>, %169, %cst_72 [1] : vector<8x32xf32> to vector<8xf32>
    %171 = vector.shape_cast %170 : vector<8xf32> to vector<8x1xf32>
    %cst_73 = arith.constant 3.200000e+01 : f32
    %172 = vector.broadcast %cst_73 : f32 to vector<8x1xf32>
    %173 = arith.divf %171, %172 : vector<8x1xf32>
    %174 = vector.broadcast %166 : vector<8x1xf32> to vector<8x32xf32>
    %175 = arith.subf %162, %174 : vector<8x32xf32>
    %cst_74 = arith.constant 9.99999974E-6 : f32
    %176 = vector.broadcast %cst_74 : f32 to vector<8x1xf32>
    %177 = arith.addf %173, %176 : vector<8x1xf32>
    %178 = math.rsqrt %177 : vector<8x1xf32>
    %179 = vector.broadcast %178 : vector<8x1xf32> to vector<8x32xf32>
    %180 = arith.mulf %175, %179 : vector<8x32xf32>
    %181 = vector.broadcast %13 : vector<1x32xf32> to vector<8x32xf32>
    %182 = arith.mulf %180, %181 : vector<8x32xf32>
    %183 = vector.broadcast %14 : vector<1x32xf32> to vector<8x32xf32>
    %184 = arith.addf %182, %183 : vector<8x32xf32>
    %c0_75 = arith.constant 0 : index
    %c0_76 = arith.constant 0 : index
    %c0_77 = arith.constant 0 : index
    %185 = vector.load %arg16[%c0_75, %c0_76, %c0_77] : memref<1x8x32xf32, #tpu.memory_space<vmem>>, vector<1x8x32xf32>
    %186 = vector.shape_cast %185 : vector<1x8x32xf32> to vector<8x32xf32>
    %187 = vector.shape_cast %184 : vector<8x32xf32> to vector<1x8x32xf32>
    tpu.vector_store %arg16[%c0_75, %c0_76, %c0_77], %187 {strides = array<i32>} : memref<1x8x32xf32, #tpu.memory_space<vmem>>, vector<1x8x32xf32>,
    return
  }
  func.func @transform_0(%arg0: i32) -> (i32, i32, i32) {
    %c0_i32 = arith.constant 0 : i32
    %c0_i32_0 = arith.constant 0 : i32
    %c0_i32_1 = arith.constant 0 : i32
    return %arg0, %c0_i32, %c0_i32_0 : i32, i32, i32
  }
  func.func @transform_1(%arg0: i32) -> (i32, i32) {
    %c0_i32 = arith.constant 0 : i32
    %c0_i32_0 = arith.constant 0 : i32
    %c0_i32_1 = arith.constant 0 : i32
    return %c0_i32, %c0_i32_0 : i32, i32
  }
  func.func @transform_2(%arg0: i32) -> (i32, i32) {
    %c0_i32 = arith.constant 0 : i32
    %c0_i32_0 = arith.constant 0 : i32
    %c0_i32_1 = arith.constant 0 : i32
    return %c0_i32, %c0_i32_0 : i32, i32
  }
  func.func @transform_3(%arg0: i32) -> (i32, i32, i32) {
    %c0_i32 = arith.constant 0 : i32
    %c0_i32_0 = arith.constant 0 : i32
    %c0_i32_1 = arith.constant 0 : i32
    %c0_i32_2 = arith.constant 0 : i32
    return %c0_i32, %c0_i32_0, %c0_i32_1 : i32, i32, i32
  }
  func.func @transform_4(%arg0: i32) -> (i32, i32) {
    %c0_i32 = arith.constant 0 : i32
    %c0_i32_0 = arith.constant 0 : i32
    %c0_i32_1 = arith.constant 0 : i32
    return %c0_i32, %c0_i32_0 : i32, i32
  }
  func.func @transform_5(%arg0: i32) -> (i32, i32) {
    %c0_i32 = arith.constant 0 : i32
    %c0_i32_0 = arith.constant 0 : i32
    %c0_i32_1 = arith.constant 0 : i32
    return %c0_i32, %c0_i32_0 : i32, i32
  }
  func.func @transform_6(%arg0: i32) -> (i32, i32) {
    %c0_i32 = arith.constant 0 : i32
    %c0_i32_0 = arith.constant 0 : i32
    %c0_i32_1 = arith.constant 0 : i32
    return %c0_i32, %c0_i32_0 : i32, i32
  }
  func.func @transform_7(%arg0: i32) -> (i32, i32) {
    %c0_i32 = arith.constant 0 : i32
    %c0_i32_0 = arith.constant 0 : i32
    %c0_i32_1 = arith.constant 0 : i32
    return %c0_i32, %c0_i32_0 : i32, i32
  }
  func.func @transform_8(%arg0: i32) -> (i32, i32) {
    %c0_i32 = arith.constant 0 : i32
    %c0_i32_0 = arith.constant 0 : i32
    %c0_i32_1 = arith.constant 0 : i32
    return %c0_i32, %c0_i32_0 : i32, i32
  }
  func.func @transform_9(%arg0: i32) -> (i32, i32) {
    %c0_i32 = arith.constant 0 : i32
    %c0_i32_0 = arith.constant 0 : i32
    %c0_i32_1 = arith.constant 0 : i32
    return %c0_i32, %c0_i32_0 : i32, i32
  }
  func.func @transform_10(%arg0: i32) -> (i32, i32) {
    %c0_i32 = arith.constant 0 : i32
    %c0_i32_0 = arith.constant 0 : i32
    %c0_i32_1 = arith.constant 0 : i32
    return %c0_i32, %c0_i32_0 : i32, i32
  }
  func.func @transform_11(%arg0: i32) -> (i32, i32) {
    %c0_i32 = arith.constant 0 : i32
    %c0_i32_0 = arith.constant 0 : i32
    %c0_i32_1 = arith.constant 0 : i32
    return %c0_i32, %c0_i32_0 : i32, i32
  }
  func.func @transform_12(%arg0: i32) -> (i32, i32) {
    %c0_i32 = arith.constant 0 : i32
    %c0_i32_0 = arith.constant 0 : i32
    %c0_i32_1 = arith.constant 0 : i32
    return %c0_i32, %c0_i32_0 : i32, i32
  }
  func.func @transform_13(%arg0: i32) -> (i32, i32) {
    %c0_i32 = arith.constant 0 : i32
    %c0_i32_0 = arith.constant 0 : i32
    %c0_i32_1 = arith.constant 0 : i32
    return %c0_i32, %c0_i32_0 : i32, i32
  }
  func.func @transform_14(%arg0: i32) -> (i32, i32) {
    %c0_i32 = arith.constant 0 : i32
    %c0_i32_0 = arith.constant 0 : i32
    %c0_i32_1 = arith.constant 0 : i32
    return %c0_i32, %c0_i32_0 : i32, i32
  }
  func.func @transform_15(%arg0: i32) -> (i32, i32, i32) {
    %c0_i32 = arith.constant 0 : i32
    %c0_i32_0 = arith.constant 0 : i32
    %c0_i32_1 = arith.constant 0 : i32
    return %arg0, %c0_i32, %c0_i32_0 : i32, i32, i32
  }
}

</mosaic_0001>

<llo_original>
// kernel: tpu_custom_call.1
$region0: #{tpu_custom_call.1}
  #allocation0 [shape = 'u32[]', space=smem, size = 0x4, offset = 0x4, fixed_abs, tag = 'smem constant byte address 0x4 - core index']
  #allocation1 [shape = 'u32[72,128]{1,0:T(1,128)}', space=vmem, size = 0x9000, scoped, tag = 'internal scratch']
  %s0 = inlined_call_operand.vmem [shape: f32[2,8,32], index: 0, kind: input, shape index: {}]
  %s1 = inlined_call_operand.vmem [shape: bf16[32,96], index: 1, kind: input, shape index: {}]
  %s2 = inlined_call_operand.vmem [shape: f32[1,96], index: 2, kind: input, shape index: {}]
  %s3 = inlined_call_operand.vmem [shape: bf16[4,8,32], index: 3, kind: input, shape index: {}]
  %s4 = inlined_call_operand.vmem [shape: f32[1,32], index: 4, kind: input, shape index: {}]
  %s5 = inlined_call_operand.vmem [shape: f32[1,32], index: 5, kind: input, shape index: {}]
  %s6 = inlined_call_operand.vmem [shape: f32[1,32], index: 6, kind: input, shape index: {}]
  %s7 = inlined_call_operand.hbm [shape: bf16[32,64], index: 7, kind: input, shape index: {}]
  %s8 = inlined_call_operand.vmem [shape: f32[1,64], index: 8, kind: input, shape index: {}]
  %s9 = inlined_call_operand.vmem [shape: f32[1,64], index: 9, kind: input, shape index: {}]
  %s10 = inlined_call_operand.vmem [shape: f32[1,64], index: 10, kind: input, shape index: {}]
  %s11 = inlined_call_operand.vmem [shape: bf16[64,32], index: 11, kind: input, shape index: {}]
  %s12 = inlined_call_operand.vmem [shape: f32[1,32], index: 12, kind: input, shape index: {}]
  %s13 = inlined_call_operand.vmem [shape: f32[1,32], index: 13, kind: input, shape index: {}]
  %s14 = inlined_call_operand.vmem [shape: f32[1,32], index: 14, kind: input, shape index: {}]
  %s15 = inlined_call_operand.hbm [shape: f32[2,8,32], index: 15, kind: output, shape index: {}]
  %s16 = sld [smem:[#allocation0]]
  $region97: #{tpu_custom_call.1} parent=0
    _
  %s18 = ssub.s32 1, %s16
  %s19 = scalar_select 0, %s18, %s16
  $region1: #{tpu_custom_call.1} parent=0
    #allocation2 [shape = 'u8[8192]{0}', space=vmem, size = 0x2000, scoped, tag = 'input window, operand 7, single buffered']
    #allocation3 [shape = 's32[2]{0}', space=sflag, size = 0x8, scoped, tag = 'scoped memory for tpu_custom_call.1']
    #allocation4 [shape = 's32[2]{0}', space=sflag, size = 0x8, scoped, tag = 'scoped memory for tpu_custom_call.1']
    #allocation5 [shape = 'u8[8192]{0}', space=vmem, size = 0x2000, scoped, tag = 'output window, operand 0']
    %20 = vsyncpa [#allocation3], 0
    %21 = vsyncpa [#allocation4], 0
    %s22 = scalar_lea.sflag [#allocation4], 1
    %23 = vsyncpa %s22, 0
    loop: start=0, step=1, limit=4
    $region2: #{tpu_custom_call.1} parent=1 // loop_pre_header
      _
    $region3: #{tpu_custom_call.1} parent=1 // loop_header
      %s25 = sphi 0, %s29
      %p26 = scmp.ge.s32.totalorder %s25, 4
      %s35 = sphi 0, %s37
      %s38 = sphi 0, %s35
      %s39 = sphi 0, %s38
      %s55 = sphi 0, %s39
      %s59 = sphi 0, %s59
      %s61 = sphi 0, %s59
      %s62 = sphi 0, %s61
      %s76 = sphi 0, %s62
      %s80 = sphi 0, %s80
      %s82 = sphi 0, %s80
      %s83 = sphi 0, %s82
      %s97 = sphi 0, %s83
      %s101 = sphi 0, %s101
      %s103 = sphi 0, %s101
      %s104 = sphi 0, %s103
      %s118 = sphi 0, %s104
      %s122 = sphi 0, %s122
      %s124 = sphi 0, %s122
      %s125 = sphi 0, %s124
      %s139 = sphi 0, %s125
      %s143 = sphi 0, %s143
      %s145 = sphi 0, %s143
      %s146 = sphi 0, %s145
      %s160 = sphi 0, %s146
      %s164 = sphi 0, %s164
      %s166 = sphi 0, %s164
      %s167 = sphi 0, %s166
      %s181 = sphi 0, %s167
      %s185 = sphi 0, %s185
      %s187 = sphi 0, %s185
      %s188 = sphi 0, %s187
      %s202 = sphi 0, %s188
      %s206 = sphi 0, %s206
      %s208 = sphi 0, %s206
      %s209 = sphi 0, %s208
      %s223 = sphi 0, %s209
      %s227 = sphi 0, %s227
      %s229 = sphi 0, %s227
      %s230 = sphi 0, %s229
      %s244 = sphi 0, %s230
      %s248 = sphi 0, %s248
      %s250 = sphi 0, %s248
      %s251 = sphi 0, %s250
      %s265 = sphi 0, %s251
      %s269 = sphi 0, %s269
      %s271 = sphi 0, %s269
      %s272 = sphi 0, %s271
      %s286 = sphi 0, %s272
      %s290 = sphi 0, %s290
      %s292 = sphi 0, %s290
      %s293 = sphi 0, %s292
      %s307 = sphi 0, %s293
      %s311 = sphi 0, %s311
      %s313 = sphi 0, %s311
      %s314 = sphi 0, %s313
      %s328 = sphi 0, %s314
      %s332 = sphi 0, %s332
      %s334 = sphi 0, %s332
      %s335 = sphi 0, %s334
      %s349 = sphi 0, %s335
      %s355 = sphi 0, %s357
      %s358 = sphi 0, %s355
      %s359 = sphi 0, %s358
      %s375 = sphi 0, %s359
    $region4: #{tpu_custom_call.1} parent=1 // loop_header_branch
      %28 = sbr.rel (%p26) target = $region8
    $region5: #{tpu_custom_call.1} parent=1 // loop_body
      %s30 = ssub.s32 %s25, 1
      %s31 = ssub.s32 %s25, 2
      %s32 = sadd.s32 %s25, 1
      %s33 = ssub.s32 %s25, %s32
      %p34 = scmp.eq.s32.totalorder %s33, 0
      %s36 = sadd.s32 %s35, 1
      %s37 = scalar_select %p34, %s35, %s36
      %p40 = pneg %p34
      %p41 = scmp.eq.s32.totalorder %s25, 1
      %p42 = por %p40, %p41
      %p43 = scmp.ne.s32.totalorder %s35, %s38
      %p44 = scmp.eq.s32.totalorder %s25, 0
      %p45 = por %p43, %p44
      %p46 = scmp.ne.s32.totalorder %s35, %s38
      %p47 = scmp.eq.s32.totalorder %s30, 1
      %p48 = por %p46, %p47
      %p49 = scmp.ne.s32.totalorder %s38, %s39
      %p50 = scmp.eq.s32.totalorder %s30, 0
      %p51 = por %p49, %p50
      %p52 = scmp.ne.s32.totalorder %s38, %s39
      %p53 = scmp.eq.s32.totalorder %s31, 1
      %p54 = por %p52, %p53
      %p56 = scmp.ne.s32.totalorder %s39, %s55
      %p57 = scmp.eq.s32.totalorder %s31, 0
      %p58 = por %p56, %p57
      %s60 = sadd.s32 %s59, 1
      %p63 = scmp.eq.s32.totalorder %s25, 1
      %p64 = scmp.ne.s32.totalorder %s59, %s61
      %p65 = scmp.eq.s32.totalorder %s25, 0
      %p66 = por %p64, %p65
      %p67 = scmp.ne.s32.totalorder %s59, %s61
      %p68 = scmp.eq.s32.totalorder %s30, 1
      %p69 = por %p67, %p68
      %p70 = scmp.ne.s32.totalorder %s61, %s62
      %p71 = scmp.eq.s32.totalorder %s30, 0
      %p72 = por %p70, %p71
      %p73 = scmp.ne.s32.totalorder %s61, %s62
      %p74 = scmp.eq.s32.totalorder %s31, 1
      %p75 = por %p73, %p74
      %p77 = scmp.ne.s32.totalorder %s62, %s76
      %p78 = scmp.eq.s32.totalorder %s31, 0
      %p79 = por %p77, %p78
      %s81 = sadd.s32 %s80, 1
      %p84 = scmp.eq.s32.totalorder %s25, 1
      %p85 = scmp.ne.s32.totalorder %s80, %s82
      %p86 = scmp.eq.s32.totalorder %s25, 0
      %p87 = por %p85, %p86
      %p88 = scmp.ne.s32.totalorder %s80, %s82
      %p89 = scmp.eq.s32.totalorder %s30, 1
      %p90 = por %p88, %p89
      %p91 = scmp.ne.s32.totalorder %s82, %s83
      %p92 = scmp.eq.s32.totalorder %s30, 0
      %p93 = por %p91, %p92
      %p94 = scmp.ne.s32.totalorder %s82, %s83
      %p95 = scmp.eq.s32.totalorder %s31, 1
      %p96 = por %p94, %p95
      %p98 = scmp.ne.s32.totalorder %s83, %s97
      %p99 = scmp.eq.s32.totalorder %s31, 0
      %p100 = por %p98, %p99
      %s102 = sadd.s32 %s101, 1
      %p105 = scmp.eq.s32.totalorder %s25, 1
      %p106 = scmp.ne.s32.totalorder %s101, %s103
      %p107 = scmp.eq.s32.totalorder %s25, 0
      %p108 = por %p106, %p107
      %p109 = scmp.ne.s32.totalorder %s101, %s103
      %p110 = scmp.eq.s32.totalorder %s30, 1
      %p111 = por %p109, %p110
      %p112 = scmp.ne.s32.totalorder %s103, %s104
      %p113 = scmp.eq.s32.totalorder %s30, 0
      %p114 = por %p112, %p113
      %p115 = scmp.ne.s32.totalorder %s103, %s104
      %p116 = scmp.eq.s32.totalorder %s31, 1
      %p117 = por %p115, %p116
      %p119 = scmp.ne.s32.totalorder %s104, %s118
      %p120 = scmp.eq.s32.totalorder %s31, 0
      %p121 = por %p119, %p120
      %s123 = sadd.s32 %s122, 1
      %p126 = scmp.eq.s32.totalorder %s25, 1
      %p127 = scmp.ne.s32.totalorder %s122, %s124
      %p128 = scmp.eq.s32.totalorder %s25, 0
      %p129 = por %p127, %p128
      %p130 = scmp.ne.s32.totalorder %s122, %s124
      %p131 = scmp.eq.s32.totalorder %s30, 1
      %p132 = por %p130, %p131
      %p133 = scmp.ne.s32.totalorder %s124, %s125
      %p134 = scmp.eq.s32.totalorder %s30, 0
      %p135 = por %p133, %p134
      %p136 = scmp.ne.s32.totalorder %s124, %s125
      %p137 = scmp.eq.s32.totalorder %s31, 1
      %p138 = por %p136, %p137
      %p140 = scmp.ne.s32.totalorder %s125, %s139
      %p141 = scmp.eq.s32.totalorder %s31, 0
      %p142 = por %p140, %p141
      %s144 = sadd.s32 %s143, 1
      %p147 = scmp.eq.s32.totalorder %s25, 1
      %p148 = scmp.ne.s32.totalorder %s143, %s145
      %p149 = scmp.eq.s32.totalorder %s25, 0
      %p150 = por %p148, %p149
      %p151 = scmp.ne.s32.totalorder %s143, %s145
      %p152 = scmp.eq.s32.totalorder %s30, 1
      %p153 = por %p151, %p152
      %p154 = scmp.ne.s32.totalorder %s145, %s146
      %p155 = scmp.eq.s32.totalorder %s30, 0
      %p156 = por %p154, %p155
      %p157 = scmp.ne.s32.totalorder %s145, %s146
      %p158 = scmp.eq.s32.totalorder %s31, 1
      %p159 = por %p157, %p158
      %p161 = scmp.ne.s32.totalorder %s146, %s160
      %p162 = scmp.eq.s32.totalorder %s31, 0
      %p163 = por %p161, %p162
      %s165 = sadd.s32 %s164, 1
      %p168 = scmp.eq.s32.totalorder %s25, 1
      %p169 = scmp.ne.s32.totalorder %s164, %s166
      %p170 = scmp.eq.s32.totalorder %s25, 0
      %p171 = por %p169, %p170
      %p172 = scmp.ne.s32.totalorder %s164, %s166
      %p173 = scmp.eq.s32.totalorder %s30, 1
      %p174 = por %p172, %p173
      %p175 = scmp.ne.s32.totalorder %s166, %s167
      %p176 = scmp.eq.s32.totalorder %s30, 0
      %p177 = por %p175, %p176
      %p178 = scmp.ne.s32.totalorder %s166, %s167
      %p179 = scmp.eq.s32.totalorder %s31, 1
      %p180 = por %p178, %p179
      %p182 = scmp.ne.s32.totalorder %s167, %s181
      %p183 = scmp.eq.s32.totalorder %s31, 0
      %p184 = por %p182, %p183
      %s186 = sadd.s32 %s185, 1
      %p189 = scmp.eq.s32.totalorder %s25, 1
      %p190 = scmp.ne.s32.totalorder %s185, %s187
      %p191 = scmp.eq.s32.totalorder %s25, 0
      %p192 = por %p190, %p191
      %p193 = scmp.ne.s32.totalorder %s185, %s187
      %p194 = scmp.eq.s32.totalorder %s30, 1
      %p195 = por %p193, %p194
      %p196 = scmp.ne.s32.totalorder %s187, %s188
      %p197 = scmp.eq.s32.totalorder %s30, 0
      %p198 = por %p196, %p197
      %p199 = scmp.ne.s32.totalorder %s187, %s188
      %p200 = scmp.eq.s32.totalorder %s31, 1
      %p201 = por %p199, %p200
      %p203 = scmp.ne.s32.totalorder %s188, %s202
      %p204 = scmp.eq.s32.totalorder %s31, 0
      %p205 = por %p203, %p204
      %s207 = sadd.s32 %s206, 1
      %p210 = scmp.eq.s32.totalorder %s25, 1
      %p211 = scmp.ne.s32.totalorder %s206, %s208
      %p212 = scmp.eq.s32.totalorder %s25, 0
      %p213 = por %p211, %p212
      %p214 = scmp.ne.s32.totalorder %s206, %s208
      %p215 = scmp.eq.s32.totalorder %s30, 1
      %p216 = por %p214, %p215
      %p217 = scmp.ne.s32.totalorder %s208, %s209
      %p218 = scmp.eq.s32.totalorder %s30, 0
      %p219 = por %p217, %p218
      %p220 = scmp.ne.s32.totalorder %s208, %s209
      %p221 = scmp.eq.s32.totalorder %s31, 1
      %p222 = por %p220, %p221
      %p224 = scmp.ne.s32.totalorder %s209, %s223
      %p225 = scmp.eq.s32.totalorder %s31, 0
      %p226 = por %p224, %p225
      %s228 = sadd.s32 %s227, 1
      %p231 = scmp.eq.s32.totalorder %s25, 1
      %p232 = scmp.ne.s32.totalorder %s227, %s229
      %p233 = scmp.eq.s32.totalorder %s25, 0
      %p234 = por %p232, %p233
      %p235 = scmp.ne.s32.totalorder %s227, %s229
      %p236 = scmp.eq.s32.totalorder %s30, 1
      %p237 = por %p235, %p236
      %p238 = scmp.ne.s32.totalorder %s229, %s230
      %p239 = scmp.eq.s32.totalorder %s30, 0
      %p240 = por %p238, %p239
      %p241 = scmp.ne.s32.totalorder %s229, %s230
      %p242 = scmp.eq.s32.totalorder %s31, 1
      %p243 = por %p241, %p242
      %p245 = scmp.ne.s32.totalorder %s230, %s244
      %p246 = scmp.eq.s32.totalorder %s31, 0
      %p247 = por %p245, %p246
      %s249 = sadd.s32 %s248, 1
      %p252 = scmp.eq.s32.totalorder %s25, 1
      %p253 = scmp.ne.s32.totalorder %s248, %s250
      %p254 = scmp.eq.s32.totalorder %s25, 0
      %p255 = por %p253, %p254
      %p256 = scmp.ne.s32.totalorder %s248, %s250
      %p257 = scmp.eq.s32.totalorder %s30, 1
      %p258 = por %p256, %p257
      %p259 = scmp.ne.s32.totalorder %s250, %s251
      %p260 = scmp.eq.s32.totalorder %s30, 0
      %p261 = por %p259, %p260
      %p262 = scmp.ne.s32.totalorder %s250, %s251
      %p263 = scmp.eq.s32.totalorder %s31, 1
      %p264 = por %p262, %p263
      %p266 = scmp.ne.s32.totalorder %s251, %s265
      %p267 = scmp.eq.s32.totalorder %s31, 0
      %p268 = por %p266, %p267
      %s270 = sadd.s32 %s269, 1
      %p273 = scmp.eq.s32.totalorder %s25, 1
      %p274 = scmp.ne.s32.totalorder %s269, %s271
      %p275 = scmp.eq.s32.totalorder %s25, 0
      %p276 = por %p274, %p275
      %p277 = scmp.ne.s32.totalorder %s269, %s271
      %p278 = scmp.eq.s32.totalorder %s30, 1
      %p279 = por %p277, %p278
      %p280 = scmp.ne.s32.totalorder %s271, %s272
      %p281 = scmp.eq.s32.totalorder %s30, 0
      %p282 = por %p280, %p281
      %p283 = scmp.ne.s32.totalorder %s271, %s272
      %p284 = scmp.eq.s32.totalorder %s31, 1
      %p285 = por %p283, %p284
      %p287 = scmp.ne.s32.totalorder %s272, %s286
      %p288 = scmp.eq.s32.totalorder %s31, 0
      %p289 = por %p287, %p288
      %s291 = sadd.s32 %s290, 1
      %p294 = scmp.eq.s32.totalorder %s25, 1
      %p295 = scmp.ne.s32.totalorder %s290, %s292
      %p296 = scmp.eq.s32.totalorder %s25, 0
      %p297 = por %p295, %p296
      %p298 = scmp.ne.s32.totalorder %s290, %s292
      %p299 = scmp.eq.s32.totalorder %s30, 1
      %p300 = por %p298, %p299
      %p301 = scmp.ne.s32.totalorder %s292, %s293
      %p302 = scmp.eq.s32.totalorder %s30, 0
      %p303 = por %p301, %p302
      %p304 = scmp.ne.s32.totalorder %s292, %s293
      %p305 = scmp.eq.s32.totalorder %s31, 1
      %p306 = por %p304, %p305
      %p308 = scmp.ne.s32.totalorder %s293, %s307
      %p309 = scmp.eq.s32.totalorder %s31, 0
      %p310 = por %p308, %p309
      %s312 = sadd.s32 %s311, 1
      %p315 = scmp.eq.s32.totalorder %s25, 1
      %p316 = scmp.ne.s32.totalorder %s311, %s313
      %p317 = scmp.eq.s32.totalorder %s25, 0
      %p318 = por %p316, %p317
      %p319 = scmp.ne.s32.totalorder %s311, %s313
      %p320 = scmp.eq.s32.totalorder %s30, 1
      %p321 = por %p319, %p320
      %p322 = scmp.ne.s32.totalorder %s313, %s314
      %p323 = scmp.eq.s32.totalorder %s30, 0
      %p324 = por %p322, %p323
      %p325 = scmp.ne.s32.totalorder %s313, %s314
      %p326 = scmp.eq.s32.totalorder %s31, 1
      %p327 = por %p325, %p326
      %p329 = scmp.ne.s32.totalorder %s314, %s328
      %p330 = scmp.eq.s32.totalorder %s31, 0
      %p331 = por %p329, %p330
      %s333 = sadd.s32 %s332, 1
      %p336 = scmp.eq.s32.totalorder %s25, 1
      %p337 = scmp.ne.s32.totalorder %s332, %s334
      %p338 = scmp.eq.s32.totalorder %s25, 0
      %p339 = por %p337, %p338
      %p340 = scmp.ne.s32.totalorder %s332, %s334
      %p341 = scmp.eq.s32.totalorder %s30, 1
      %p342 = por %p340, %p341
      %p343 = scmp.ne.s32.totalorder %s334, %s335
      %p344 = scmp.eq.s32.totalorder %s30, 0
      %p345 = por %p343, %p344
      %p346 = scmp.ne.s32.totalorder %s334, %s335
      %p347 = scmp.eq.s32.totalorder %s31, 1
      %p348 = por %p346, %p347
      %p350 = scmp.ne.s32.totalorder %s335, %s349
      %p351 = scmp.eq.s32.totalorder %s31, 0
      %p352 = por %p350, %p351
      %s353 = ssub.s32 %s25, %s32
      %p354 = scmp.eq.s32.totalorder %s353, 0
      %s356 = sadd.s32 %s355, 1
      %s357 = scalar_select %p354, %s355, %s356
      %p360 = pneg %p354
      %p361 = scmp.eq.s32.totalorder %s25, 1
      %p362 = por %p360, %p361
      %p363 = scmp.ne.s32.totalorder %s355, %s358
      %p364 = scmp.eq.s32.totalorder %s25, 0
      %p365 = por %p363, %p364
      %p366 = scmp.ne.s32.totalorder %s355, %s358
      %p367 = scmp.eq.s32.totalorder %s30, 1
      %p368 = por %p366, %p367
      %p369 = scmp.ne.s32.totalorder %s358, %s359
      %p370 = scmp.eq.s32.totalorder %s30, 0
      %p371 = por %p369, %p370
      %p372 = scmp.ne.s32.totalorder %s358, %s359
      %p373 = scmp.eq.s32.totalorder %s31, 1
      %p374 = por %p372, %p373
      %p376 = scmp.ne.s32.totalorder %s359, %s375
      %p377 = scmp.eq.s32.totalorder %s31, 0
      %p378 = por %p376, %p377
      %p379 = scmp.le.s32.totalorder 1, %s25
      %p380 = scmp.lt.s32.totalorder %s25, 3
      %p381 = pnand %p379, %p380
      %p382 = pneg %p381
      // Predicated region
      $region9: #{tpu_custom_call.1} parent=5 // pred_check
        _
      $region10: #{tpu_custom_call.1} parent=5 // pred_check_branch
        %384 = sbr.rel (%p381) target = $region12
      $region11: #{tpu_custom_call.1} parent=5 // pred_region
        %s385 = ssub.s32 %s25, 1
        // Predicated region
        $region13: #{tpu_custom_call.1} parent=11 // pred_check
          %p386 = pneg %p72
        $region14: #{tpu_custom_call.1} parent=11 // pred_check_branch
          %388 = sbr.rel (%p386) target = $region16
        $region15: #{tpu_custom_call.1} parent=11 // pred_region
          _
        $region16: #{tpu_custom_call.1} parent=11 // pred_fallthru
          _
        // Predicated region
        $region17: #{tpu_custom_call.1} parent=11 // pred_check
          %p389 = pneg %p93
        $region18: #{tpu_custom_call.1} parent=11 // pred_check_branch
          %391 = sbr.rel (%p389) target = $region20
        $region19: #{tpu_custom_call.1} parent=11 // pred_region
          _
        $region20: #{tpu_custom_call.1} parent=11 // pred_fallthru
          _
        // Predicated region
        $region21: #{tpu_custom_call.1} parent=11 // pred_check
          %p392 = pneg %p114
        $region22: #{tpu_custom_call.1} parent=11 // pred_check_branch
          %394 = sbr.rel (%p392) target = $region24
        $region23: #{tpu_custom_call.1} parent=11 // pred_region
          _
        $region24: #{tpu_custom_call.1} parent=11 // pred_fallthru
          _
        // Predicated region
        $region25: #{tpu_custom_call.1} parent=11 // pred_check
          %p395 = pneg %p135
        $region26: #{tpu_custom_call.1} parent=11 // pred_check_branch
          %397 = sbr.rel (%p395) target = $region28
        $region27: #{tpu_custom_call.1} parent=11 // pred_region
          _
        $region28: #{tpu_custom_call.1} parent=11 // pred_fallthru
          _
        // Predicated region
        $region29: #{tpu_custom_call.1} parent=11 // pred_check
          %p398 = pneg %p156
        $region30: #{tpu_custom_call.1} parent=11 // pred_check_branch
          %400 = sbr.rel (%p398) target = $region32
        $region31: #{tpu_custom_call.1} parent=11 // pred_region
          _
        $region32: #{tpu_custom_call.1} parent=11 // pred_fallthru
          _
        // Predicated region
        $region33: #{tpu_custom_call.1} parent=11 // pred_check
          %p401 = pneg %p177
        $region34: #{tpu_custom_call.1} parent=11 // pred_check_branch
          %403 = sbr.rel (%p401) target = $region36
        $region35: #{tpu_custom_call.1} parent=11 // pred_region
          _
        $region36: #{tpu_custom_call.1} parent=11 // pred_fallthru
          _
        // Predicated region
        $region37: #{tpu_custom_call.1} parent=11 // pred_check
          %p404 = pneg %p198
        $region38: #{tpu_custom_call.1} parent=11 // pred_check_branch
          %406 = sbr.rel (%p404) target = $region40
        $region39: #{tpu_custom_call.1} parent=11 // pred_region
          %408 = vsyncadd [#allocation3], 0
          %s409 = sshll.u32 %s7, 4
          %s410 = int_to_ptr.hbm [resolvable:$true] %s409
          %s411 = sshll.u32 [#allocation2], 4
          %s412 = int_to_ptr.vmem [resolvable:$true] %s411
          %417 = dma.hbm_to_vmem [thread:$0]  %s410, 256, %s412, [#allocation3], 64, 64, 4
        $region40: #{tpu_custom_call.1} parent=11 // pred_fallthru
          _
        // Predicated region
        $region41: #{tpu_custom_call.1} parent=11 // pred_check
          %p418 = pneg %p219
        $region42: #{tpu_custom_call.1} parent=11 // pred_check_branch
          %420 = sbr.rel (%p418) target = $region44
        $region43: #{tpu_custom_call.1} parent=11 // pred_region
          _
        $region44: #{tpu_custom_call.1} parent=11 // pred_fallthru
          _
        // Predicated region
        $region45: #{tpu_custom_call.1} parent=11 // pred_check
          %p421 = pneg %p240
        $region46: #{tpu_custom_call.1} parent=11 // pred_check_branch
          %423 = sbr.rel (%p421) target = $region48
        $region47: #{tpu_custom_call.1} parent=11 // pred_region
          _
        $region48: #{tpu_custom_call.1} parent=11 // pred_fallthru
          _
        // Predicated region
        $region49: #{tpu_custom_call.1} parent=11 // pred_check
          %p424 = pneg %p261
        $region50: #{tpu_custom_call.1} parent=11 // pred_check_branch
          %426 = sbr.rel (%p424) target = $region52
        $region51: #{tpu_custom_call.1} parent=11 // pred_region
          _
        $region52: #{tpu_custom_call.1} parent=11 // pred_fallthru
          _
        // Predicated region
        $region53: #{tpu_custom_call.1} parent=11 // pred_check
          %p427 = pneg %p282
        $region54: #{tpu_custom_call.1} parent=11 // pred_check_branch
          %429 = sbr.rel (%p427) target = $region56
        $region55: #{tpu_custom_call.1} parent=11 // pred_region
          _
        $region56: #{tpu_custom_call.1} parent=11 // pred_fallthru
          _
        // Predicated region
        $region57: #{tpu_custom_call.1} parent=11 // pred_check
          %p430 = pneg %p303
        $region58: #{tpu_custom_call.1} parent=11 // pred_check_branch
          %432 = sbr.rel (%p430) target = $region60
        $region59: #{tpu_custom_call.1} parent=11 // pred_region
          _
        $region60: #{tpu_custom_call.1} parent=11 // pred_fallthru
          _
        // Predicated region
        $region61: #{tpu_custom_call.1} parent=11 // pred_check
          %p433 = pneg %p324
        $region62: #{tpu_custom_call.1} parent=11 // pred_check_branch
          %435 = sbr.rel (%p433) target = $region64
        $region63: #{tpu_custom_call.1} parent=11 // pred_region
          _
        $region64: #{tpu_custom_call.1} parent=11 // pred_fallthru
          _
        // Predicated region
        $region65: #{tpu_custom_call.1} parent=11 // pred_check
          %p436 = pneg %p345
        $region66: #{tpu_custom_call.1} parent=11 // pred_check_branch
          %438 = sbr.rel (%p436) target = $region68
        $region67: #{tpu_custom_call.1} parent=11 // pred_region
          _
        $region68: #{tpu_custom_call.1} parent=11 // pred_fallthru
          _
      $region12: #{tpu_custom_call.1} parent=5 // pred_fallthru
        _
      %p439 = scmp.lt.s32.totalorder %s25, 2
      // Predicated region
      $region69: #{tpu_custom_call.1} parent=5 // pred_check
        %p440 = pneg %p439
      $region70: #{tpu_custom_call.1} parent=5 // pred_check_branch
        %442 = sbr.rel (%p440) target = $region72
      $region71: #{tpu_custom_call.1} parent=5 // pred_region
        // Predicated region
        $region73: #{tpu_custom_call.1} parent=71 // pred_check
          %p443 = pneg %p45
        $region74: #{tpu_custom_call.1} parent=71 // pred_check_branch
          %445 = sbr.rel (%p443) target = $region76
        $region75: #{tpu_custom_call.1} parent=71 // pred_region
          %p446 = scmp.lt.s32.totalorder %s25, 1
          %s447 = scalar_select %p446, %s25, 1
          %s448 = smul.addr %s447, 8
          %s449 = scalar_lea.vmem %s0, %s448
        $region76: #{tpu_custom_call.1} parent=71 // pred_fallthru
          _
      $region72: #{tpu_custom_call.1} parent=5 // pred_fallthru
        _
      %p450 = scmp.le.s32.totalorder 1, %s25
      %p451 = scmp.lt.s32.totalorder %s25, 3
      %p452 = pnand %p450, %p451
      %p453 = pneg %p452
      // Predicated region
      $region77: #{tpu_custom_call.1} parent=5 // pred_check
        _
      $region78: #{tpu_custom_call.1} parent=5 // pred_check_branch
        %455 = sbr.rel (%p452) target = $region80
      $region79: #{tpu_custom_call.1} parent=5 // pred_region
        %s456 = ssub.s32 %s25, 1
        // Predicated region
        $region81: #{tpu_custom_call.1} parent=79 // pred_check
          %p457 = pneg %p198
        $region82: #{tpu_custom_call.1} parent=79 // pred_check_branch
          %459 = sbr.rel (%p457) target = $region84
        $region83: #{tpu_custom_call.1} parent=79 // pred_region
          %461 = dma.done [#allocation3], 256
        $region84: #{tpu_custom_call.1} parent=79 // pred_fallthru
          _
        %p462 = scmp.lt.s32.totalorder %s30, 1
        %s463 = scalar_select %p462, %s30, 1
        %s464 = smul.addr %s463, 8
        %s465 = scalar_lea.vmem %s0, %s464
        %p466 = pneg %p51
        %p467 = pneg %p48
        %p468 = pneg %p72
        %p469 = pneg %p69
        %p470 = pneg %p93
        %p471 = pneg %p90
        %p472 = pneg %p114
        %p473 = pneg %p111
        %p474 = pneg %p135
        %p475 = pneg %p132
        %p476 = pneg %p156
        %p477 = pneg %p153
        %p478 = pneg %p177
        %p479 = pneg %p174
        %p480 = pneg %p198
        %p481 = pneg %p195
        %p482 = pneg %p219
        %p483 = pneg %p216
        %p484 = pneg %p240
        %p485 = pneg %p237
        %p486 = pneg %p261
        %p487 = pneg %p258
        %p488 = pneg %p282
        %p489 = pneg %p279
        %p490 = pneg %p303
        %p491 = pneg %p300
        %p492 = pneg %p324
        %p493 = pneg %p321
        %p494 = pneg %p345
        %p495 = pneg %p342
        %p496 = pneg %p371
        %p497 = pneg %p368
        %s498 = sand.u32 %s358, 1
        %s499 = scalar_lea.sflag [#allocation4], %s498
        %s500 = sand.u32 %s358, 1
        %s501 = smul.addr %s500, 8
        %s502 = scalar_lea.vmem [#allocation5], %s501
        %p503 = scmp.lt.s32.totalorder %s30, 1
        %s504 = scalar_select %p503, %s30, 1
        %s505 = smul.addr %s504, 8
        %s506 = scalar_lea.vmem %s0, %s505
        %v508 = vld [vmem:[%s506] sm:$0xff]
        %v509 = vld [vmem:[%s1] sm:$0xf]
        %v510 = vld [vmem:[%s1 + $0x4] sm:$0xf]
        %v511 = vld [vmem:[%s1 + $0x8] sm:$0xf]
        %v512 = vld [vmem:[%s1 + $0xc] sm:$0xf]
        %v513 = vld [vmem:[%s2] sm:$0x1]
        %v514 = vld [vmem:[%s4] sm:$0x1]
        %v515 = vld [vmem:[%s5] sm:$0x1]
        %v516 = vld [vmem:[%s6] sm:$0x1]
        %v517 = vld [vmem:[#allocation2] sm:$0xf]
        %v518 = vld [vmem:[#allocation2 + $0x4] sm:$0xf]
        %v519 = vld [vmem:[#allocation2 + $0x8] sm:$0xf]
        %v520 = vld [vmem:[#allocation2 + $0xc] sm:$0xf]
        %v521 = vld [vmem:[%s8] sm:$0x1]
        %v522 = vld [vmem:[%s9] sm:$0x1]
        %v523 = vld [vmem:[%s10] sm:$0x1]
        %v524 = vld [vmem:[%s11] sm:$0xf]
        %v525 = vld [vmem:[%s11 + $0x4] sm:$0xf]
        %v526 = vld [vmem:[%s11 + $0x8] sm:$0xf]
        %v527 = vld [vmem:[%s11 + $0xc] sm:$0xf]
        %v528 = vld [vmem:[%s11 + $0x10] sm:$0xf]
        %v529 = vld [vmem:[%s11 + $0x14] sm:$0xf]
        %v530 = vld [vmem:[%s11 + $0x18] sm:$0xf]
        %v531 = vld [vmem:[%s11 + $0x1c] sm:$0xf]
        %v532 = vld [vmem:[%s12] sm:$0x1]
        %v533 = vld [vmem:[%s13] sm:$0x1]
        %v534 = vld [vmem:[%s14] sm:$0x1]
        %v535 = vpack.c.bf16 %v508, %v508
        %v537 = vperm.slane %v513, 0
        %v543 = vunpack.c.l.b16 %v509
        %v544 = vunpack.c.l.b16 %v510
        %v545 = vunpack.c.l.b16 %v511
        %v546 = vunpack.c.l.b16 %v512
        %v547 = vpack.c.b16 %v544, %v543
        %v548 = vpack.c.b16 %v546, %v545
        %vm551 = vcmask 261120
        %v553 = vsel %vm551, %v535, 0
        %555 = vmatpush.bf16.msra.mxu0 0
        %556 = vmatpush.bf16.msra.mxu0 0
        %557 = vmatpush.bf16.msra.mxu0 0
        %558 = vmatpush.bf16.msra.mxu0 0
        %559 = vmatpush.bf16.msra.mxu0 0
        %560 = vmatpush.bf16.msra.mxu0 0
        %561 = vmatpush.bf16.msra.mxu0 %v548
        %562 = vmatpush.bf16.msra.mxu0 %v547
        %563 = vmatmul.bf16.gmra.mxu0 %v553
        %v564 = vpop.f32.mrf.mxu0
        %v565 = vadd.f32 %v537, %v564
        %v566 = vpop.f32.mrf.mxu0
        %567 = vdwg.mxu0
        %569 = vrot.lane.b32.xlu0 %v565, 96
        %v570 = vpop.permute.xlu0 %569
        %vm571 = vcmask 64512
        %v572 = vsel %vm571, %v565, 0
        %v574 = vsel %vm571, %v570, 0
        %576 = vmatpush.xpose.msra.mxu0 0.0
        %577 = vmatpush.xpose.msra.mxu0 0.0
        %578 = vmatpush.xpose.msra.mxu0 0.0
        %579 = vmatpush.xpose.msra.mxu0 0.0
        %580 = vmatpush.xpose.msra.mxu0 0.0
        %581 = vmatpush.xpose.msra.mxu0 0.0
        %582 = vmatpush.xpose.msra.mxu0 0.0
        %583 = vmatpush.xpose.msra.mxu0 0.0
        %584 = vmatpush.xpose.msra.mxu0 0.0
        %585 = vmatpush.xpose.msra.mxu0 0.0
        %586 = vmatpush.xpose.msra.mxu0 0.0
        %587 = vmatpush.xpose.msra.mxu0 0.0
        %588 = vmatpush.xpose.msra.mxu0 0.0
        %589 = vmatpush.xpose.msra.mxu0 0.0
        %590 = vmatpush.xpose.msra.mxu0 0.0
        %591 = vmatpush.xpose.msra.mxu0 %v574
        %592 = vmatmul.f32.gmra.mxu0 %v572
        %v593 = vpop.f32.mrf.mxu0
        %v594 = vadd.f32 0.0, %v593
        %595 = vdwg.mxu0
        %v596 = vsel %vm571, %v594, -inf
        %597 = vmax.xlane.f32.xlu0 %v596
        %v598 = vpop.xlane.xlu0 %597
        %v599 = vsub.f32 %v594, %v598
        %v600 = vmul.f32 %v599, 1.442695
        %v601 = vpow.pop %v600
        %v602 = vsel %vm571, %v601, 0.0
        %603 = vadd.xlane.f32.xlu0 %v602
        %v604 = vpop.xlane.xlu0 %603
        %v605 = vrcp.pop %v604
        %v606 = vmul.f32 %v601, %v605
        %607 = vrot.lane.b32.xlu0 %v565, 64
        %v608 = vpop.permute.xlu0 %607
        %v611 = vsel %vm571, %v606, 0
        %613 = vmatpush.msra.mxu0 0.0
        %614 = vmatpush.msra.mxu0 0.0
        %615 = vmatpush.msra.mxu0 0.0
        %616 = vmatpush.msra.mxu0 0.0
        %617 = vmatpush.msra.mxu0 0.0
        %618 = vmatpush.msra.mxu0 0.0
        %619 = vmatpush.msra.mxu0 0.0
        %620 = vmatpush.msra.mxu0 0.0
        %621 = vmatpush.msra.mxu0 0.0
        %622 = vmatpush.msra.mxu0 0.0
        %623 = vmatpush.msra.mxu0 0.0
        %624 = vmatpush.msra.mxu0 0.0
        %625 = vmatpush.msra.mxu0 0.0
        %626 = vmatpush.msra.mxu0 0.0
        %627 = vmatpush.msra.mxu0 0.0
        %628 = vmatpush.msra.mxu0 %v608
        %629 = vmatmul.f32.gmra.mxu0 %v611
        %v630 = vpop.f32.mrf.mxu0
        %v631 = vadd.f32 0.0, %v630
        %632 = vdwg.mxu0
        %v633 = vld [vmem:[%s3] sm:$0xf]
        %v634 = vpack.c.bf16 %v631, %v631
        %635 = vrot.lane.b32.xlu0 %v565, 120
        %v636 = vpop.permute.xlu0 %635
        %637 = vrot.lane.b32.xlu0 %v565, 88
        %v638 = vpop.permute.xlu0 %637
        %v639 = vsel %vm571, %v636, 0
        %v641 = vsel %vm571, %v638, 0
        %643 = vmatpush.xpose.msra.mxu0 0.0
        %644 = vmatpush.xpose.msra.mxu0 0.0
        %645 = vmatpush.xpose.msra.mxu0 0.0
        %646 = vmatpush.xpose.msra.mxu0 0.0
        %647 = vmatpush.xpose.msra.mxu0 0.0
        %648 = vmatpush.xpose.msra.mxu0 0.0
        %649 = vmatpush.xpose.msra.mxu0 0.0
        %650 = vmatpush.xpose.msra.mxu0 0.0
        %651 = vmatpush.xpose.msra.mxu0 0.0
        %652 = vmatpush.xpose.msra.mxu0 0.0
        %653 = vmatpush.xpose.msra.mxu0 0.0
        %654 = vmatpush.xpose.msra.mxu0 0.0
        %655 = vmatpush.xpose.msra.mxu0 0.0
        %656 = vmatpush.xpose.msra.mxu0 0.0
        %657 = vmatpush.xpose.msra.mxu0 0.0
        %658 = vmatpush.xpose.msra.mxu0 %v641
        %659 = vmatmul.f32.gmra.mxu0 %v639
        %v660 = vpop.f32.mrf.mxu0
        %v661 = vadd.f32 0.0, %v660
        %662 = vdwg.mxu0
        %v663 = vsel %vm571, %v661, -inf
        %664 = vmax.xlane.f32.xlu0 %v663
        %v665 = vpop.xlane.xlu0 %664
        %v666 = vsub.f32 %v661, %v665
        %v667 = vmul.f32 %v666, 1.442695
        %v668 = vpow.pop %v667
        %v669 = vsel %vm571, %v668, 0.0
        %670 = vadd.xlane.f32.xlu0 %v669
        %v671 = vpop.xlane.xlu0 %670
        %v672 = vrcp.pop %v671
        %v673 = vmul.f32 %v668, %v672
        %674 = vrot.lane.b32.xlu0 %v565, 56
        %v675 = vpop.permute.xlu0 %674
        %v678 = vsel %vm571, %v673, 0
        %680 = vmatpush.msra.mxu0 0.0
        %681 = vmatpush.msra.mxu0 0.0
        %682 = vmatpush.msra.mxu0 0.0
        %683 = vmatpush.msra.mxu0 0.0
        %684 = vmatpush.msra.mxu0 0.0
        %685 = vmatpush.msra.mxu0 0.0
        %686 = vmatpush.msra.mxu0 0.0
        %687 = vmatpush.msra.mxu0 0.0
        %688 = vmatpush.msra.mxu0 0.0
        %689 = vmatpush.msra.mxu0 0.0
        %690 = vmatpush.msra.mxu0 0.0
        %691 = vmatpush.msra.mxu0 0.0
        %692 = vmatpush.msra.mxu0 0.0
        %693 = vmatpush.msra.mxu0 0.0
        %694 = vmatpush.msra.mxu0 0.0
        %695 = vmatpush.msra.mxu0 %v675
        %696 = vmatmul.f32.gmra.mxu0 %v678
        %v697 = vpop.f32.mrf.mxu0
        %v698 = vadd.f32 0.0, %v697
        %699 = vdwg.mxu0
        %s700 = scalar_lea.vmem %s3, 4
        %v701 = vld [vmem:[%s700] sm:$0xf]
        %v702 = vpack.c.bf16 %v698, %v698
        %v704 = vsel %vm571, %v702, 0
        %vm706 = vcmask 1043456
        %v708 = vsel %vm706, %v701, 0
        %710 = vmatpush.bf16.msra.mxu0 0
        %711 = vmatpush.bf16.msra.mxu0 0
        %712 = vmatpush.bf16.msra.mxu0 0
        %713 = vmatpush.bf16.msra.mxu0 0
        %714 = vmatpush.bf16.msra.mxu0 0
        %715 = vmatpush.bf16.msra.mxu0 0
        %716 = vmatpush.bf16.msra.mxu0 0
        %717 = vmatpush.bf16.msra.mxu0 %v708
        %718 = vmatmul.bf16.gmra.mxu0 %v704
        %v719 = vpop.f32.mrf.mxu0
        %v720 = vadd.f32 0.0, %v719
        %v721 = vpop.f32.mrf.mxu0
        %722 = vdwg.mxu0
        %v724 = vsel %vm571, %v634, 0
        %v727 = vsel %vm706, %v633, 0
        %729 = vmatpush.bf16.msra.mxu0 0
        %730 = vmatpush.bf16.msra.mxu0 0
        %731 = vmatpush.bf16.msra.mxu0 0
        %732 = vmatpush.bf16.msra.mxu0 0
        %733 = vmatpush.bf16.msra.mxu0 0
        %734 = vmatpush.bf16.msra.mxu0 0
        %735 = vmatpush.bf16.msra.mxu0 0
        %736 = vmatpush.bf16.msra.mxu0 %v727
        %737 = vmatmul.bf16.gmra.mxu0 %v724
        %v738 = vpop.f32.mrf.mxu0
        %v739 = vadd.f32 %v720, %v738
        %v740 = vpop.f32.mrf.mxu0
        %741 = vdwg.mxu0
        %742 = vrot.lane.b32.xlu0 %v565, 112
        %v743 = vpop.permute.xlu0 %742
        %744 = vrot.lane.b32.xlu0 %v565, 80
        %v745 = vpop.permute.xlu0 %744
        %v746 = vsel %vm571, %v743, 0
        %v748 = vsel %vm571, %v745, 0
        %750 = vmatpush.xpose.msra.mxu0 0.0
        %751 = vmatpush.xpose.msra.mxu0 0.0
        %752 = vmatpush.xpose.msra.mxu0 0.0
        %753 = vmatpush.xpose.msra.mxu0 0.0
        %754 = vmatpush.xpose.msra.mxu0 0.0
        %755 = vmatpush.xpose.msra.mxu0 0.0
        %756 = vmatpush.xpose.msra.mxu0 0.0
        %757 = vmatpush.xpose.msra.mxu0 0.0
        %758 = vmatpush.xpose.msra.mxu0 0.0
        %759 = vmatpush.xpose.msra.mxu0 0.0
        %760 = vmatpush.xpose.msra.mxu0 0.0
        %761 = vmatpush.xpose.msra.mxu0 0.0
        %762 = vmatpush.xpose.msra.mxu0 0.0
        %763 = vmatpush.xpose.msra.mxu0 0.0
        %764 = vmatpush.xpose.msra.mxu0 0.0
        %765 = vmatpush.xpose.msra.mxu0 %v748
        %766 = vmatmul.f32.gmra.mxu0 %v746
        %v767 = vpop.f32.mrf.mxu0
        %v768 = vadd.f32 0.0, %v767
        %769 = vdwg.mxu0
        %v770 = vsel %vm571, %v768, -inf
        %771 = vmax.xlane.f32.xlu0 %v770
        %v772 = vpop.xlane.xlu0 %771
        %v773 = vsub.f32 %v768, %v772
        %v774 = vmul.f32 %v773, 1.442695
        %v775 = vpow.pop %v774
        %v776 = vsel %vm571, %v775, 0.0
        %777 = vadd.xlane.f32.xlu0 %v776
        %v778 = vpop.xlane.xlu0 %777
        %v779 = vrcp.pop %v778
        %v780 = vmul.f32 %v775, %v779
        %781 = vrot.lane.b32.xlu0 %v565, 48
        %v782 = vpop.permute.xlu0 %781
        %v785 = vsel %vm571, %v780, 0
        %787 = vmatpush.msra.mxu0 0.0
        %788 = vmatpush.msra.mxu0 0.0
        %789 = vmatpush.msra.mxu0 0.0
        %790 = vmatpush.msra.mxu0 0.0
        %791 = vmatpush.msra.mxu0 0.0
        %792 = vmatpush.msra.mxu0 0.0
        %793 = vmatpush.msra.mxu0 0.0
        %794 = vmatpush.msra.mxu0 0.0
        %795 = vmatpush.msra.mxu0 0.0
        %796 = vmatpush.msra.mxu0 0.0
        %797 = vmatpush.msra.mxu0 0.0
        %798 = vmatpush.msra.mxu0 0.0
        %799 = vmatpush.msra.mxu0 0.0
        %800 = vmatpush.msra.mxu0 0.0
        %801 = vmatpush.msra.mxu0 0.0
        %802 = vmatpush.msra.mxu0 %v782
        %803 = vmatmul.f32.gmra.mxu0 %v785
        %v804 = vpop.f32.mrf.mxu0
        %v805 = vadd.f32 0.0, %v804
        %806 = vdwg.mxu0
        %s807 = scalar_lea.vmem %s3, 8
        %v808 = vld [vmem:[%s807] sm:$0xf]
        %v809 = vpack.c.bf16 %v805, %v805
        %v811 = vsel %vm571, %v809, 0
        %v814 = vsel %vm706, %v808, 0
        %816 = vmatpush.bf16.msra.mxu0 0
        %817 = vmatpush.bf16.msra.mxu0 0
        %818 = vmatpush.bf16.msra.mxu0 0
        %819 = vmatpush.bf16.msra.mxu0 0
        %820 = vmatpush.bf16.msra.mxu0 0
        %821 = vmatpush.bf16.msra.mxu0 0
        %822 = vmatpush.bf16.msra.mxu0 0
        %823 = vmatpush.bf16.msra.mxu0 %v814
        %824 = vmatmul.bf16.gmra.mxu0 %v811
        %v825 = vpop.f32.mrf.mxu0
        %v826 = vadd.f32 0.0, %v825
        %v827 = vpop.f32.mrf.mxu0
        %828 = vdwg.mxu0
        %v829 = vadd.f32 %v739, %v826
        %830 = vrot.lane.b32.xlu0 %v565, 104
        %v831 = vpop.permute.xlu0 %830
        %832 = vrot.lane.b32.xlu0 %v565, 72
        %v833 = vpop.permute.xlu0 %832
        %v834 = vsel %vm571, %v831, 0
        %v836 = vsel %vm571, %v833, 0
        %838 = vmatpush.xpose.msra.mxu0 0.0
        %839 = vmatpush.xpose.msra.mxu0 0.0
        %840 = vmatpush.xpose.msra.mxu0 0.0
        %841 = vmatpush.xpose.msra.mxu0 0.0
        %842 = vmatpush.xpose.msra.mxu0 0.0
        %843 = vmatpush.xpose.msra.mxu0 0.0
        %844 = vmatpush.xpose.msra.mxu0 0.0
        %845 = vmatpush.xpose.msra.mxu0 0.0
        %846 = vmatpush.xpose.msra.mxu0 0.0
        %847 = vmatpush.xpose.msra.mxu0 0.0
        %848 = vmatpush.xpose.msra.mxu0 0.0
        %849 = vmatpush.xpose.msra.mxu0 0.0
        %850 = vmatpush.xpose.msra.mxu0 0.0
        %851 = vmatpush.xpose.msra.mxu0 0.0
        %852 = vmatpush.xpose.msra.mxu0 0.0
        %853 = vmatpush.xpose.msra.mxu0 %v836
        %854 = vmatmul.f32.gmra.mxu0 %v834
        %v855 = vpop.f32.mrf.mxu0
        %v856 = vadd.f32 0.0, %v855
        %857 = vdwg.mxu0
        %v858 = vsel %vm571, %v856, -inf
        %859 = vmax.xlane.f32.xlu0 %v858
        %v860 = vpop.xlane.xlu0 %859
        %v861 = vsub.f32 %v856, %v860
        %v862 = vmul.f32 %v861, 1.442695
        %v863 = vpow.pop %v862
        %v864 = vsel %vm571, %v863, 0.0
        %865 = vadd.xlane.f32.xlu0 %v864
        %v866 = vpop.xlane.xlu0 %865
        %v867 = vrcp.pop %v866
        %v868 = vmul.f32 %v863, %v867
        %869 = vrot.lane.b32.xlu0 %v565, 40
        %v870 = vpop.permute.xlu0 %869
        %v873 = vsel %vm571, %v868, 0
        %875 = vmatpush.msra.mxu0 0.0
        %876 = vmatpush.msra.mxu0 0.0
        %877 = vmatpush.msra.mxu0 0.0
        %878 = vmatpush.msra.mxu0 0.0
        %879 = vmatpush.msra.mxu0 0.0
        %880 = vmatpush.msra.mxu0 0.0
        %881 = vmatpush.msra.mxu0 0.0
        %882 = vmatpush.msra.mxu0 0.0
        %883 = vmatpush.msra.mxu0 0.0
        %884 = vmatpush.msra.mxu0 0.0
        %885 = vmatpush.msra.mxu0 0.0
        %886 = vmatpush.msra.mxu0 0.0
        %887 = vmatpush.msra.mxu0 0.0
        %888 = vmatpush.msra.mxu0 0.0
        %889 = vmatpush.msra.mxu0 0.0
        %890 = vmatpush.msra.mxu0 %v870
        %891 = vmatmul.f32.gmra.mxu0 %v873
        %v892 = vpop.f32.mrf.mxu0
        %v893 = vadd.f32 0.0, %v892
        %894 = vdwg.mxu0
        %s895 = scalar_lea.vmem %s3, 12
        %v896 = vld [vmem:[%s895] sm:$0xf]
        %v897 = vpack.c.bf16 %v893, %v893
        %v899 = vsel %vm571, %v897, 0
        %v902 = vsel %vm706, %v896, 0
        %904 = vmatpush.bf16.msra.mxu0 0
        %905 = vmatpush.bf16.msra.mxu0 0
        %906 = vmatpush.bf16.msra.mxu0 0
        %907 = vmatpush.bf16.msra.mxu0 0
        %908 = vmatpush.bf16.msra.mxu0 0
        %909 = vmatpush.bf16.msra.mxu0 0
        %910 = vmatpush.bf16.msra.mxu0 0
        %911 = vmatpush.bf16.msra.mxu0 %v902
        %912 = vmatmul.bf16.gmra.mxu0 %v899
        %v913 = vpop.f32.mrf.mxu0
        %v914 = vadd.f32 0.0, %v913
        %v915 = vpop.f32.mrf.mxu0
        %916 = vdwg.mxu0
        %v917 = vadd.f32 %v829, %v914
        %v919 = vperm.slane %v514, 0
        %v921 = vadd.f32 %v917, %v919
        %v922 = vadd.f32 %v508, %v921
        %v923 = vsel %vm551, %v922, 0.0
        %924 = vadd.xlane.f32.xlu0 %v923
        %v925 = vpop.xlane.xlu0 %924
        %v926 = vrcp.pop 32.0
        %v927 = vmul.f32 32.0, %v926
        %v928 = vsub.f32 1.0, %v927
        %v929 = vmul.f32 %v926, %v928
        %v930 = vadd.f32 %v926, %v929
        %vm931 = vweird.f32 %v926
        %v932 = vsel %vm931, %v926, %v930
        %v933 = vmul.f32 %v925, %v932
        %v934 = vsub.f32 %v922, %v933
        %v935 = vmul.f32 %v934, %v934
        %v936 = vsel %vm551, %v935, 0.0
        %937 = vadd.xlane.f32.xlu0 %v936
        %v938 = vpop.xlane.xlu0 %937
        %v939 = vmul.f32 %v938, %v932
        %v940 = vadd.f32 %v939, 1e-05
        %v941 = vrsqrt.pop %v940
        %v942 = vmul.f32 %v941, %v940
        %v943 = vmul.f32 %v942, %v941
        %v944 = vmul.f32 0.5, %v943
        %v945 = vsub.f32 1.5, %v944
        %v946 = vmul.f32 %v941, %v945
        %vm947 = vweird.f32 %v940
        %vm948 = vweird.f32 %v941
        %vm949 = vmor %vm947, %vm948
        %v950 = vsel %vm949, %v941, %v946
        %v951 = vmul.f32 %v934, %v950
        %v953 = vperm.slane %v515, 0
        %v955 = vmul.f32 %v951, %v953
        %v957 = vperm.slane %v516, 0
        %v959 = vadd.f32 %v955, %v957
        %v960 = vpack.c.bf16 %v959, %v959
        %v962 = vperm.slane %v521, 0
        %v968 = vunpack.c.l.b16 %v517
        %v969 = vunpack.c.l.b16 %v518
        %v970 = vunpack.c.l.b16 %v519
        %v971 = vunpack.c.l.b16 %v520
        %v972 = vpack.c.b16 %v969, %v968
        %v973 = vpack.c.b16 %v971, %v970
        %v977 = vsel %vm551, %v960, 0
        %979 = vmatpush.bf16.msra.mxu0 0
        %980 = vmatpush.bf16.msra.mxu0 0
        %981 = vmatpush.bf16.msra.mxu0 0
        %982 = vmatpush.bf16.msra.mxu0 0
        %983 = vmatpush.bf16.msra.mxu0 0
        %984 = vmatpush.bf16.msra.mxu0 0
        %985 = vmatpush.bf16.msra.mxu0 %v973
        %986 = vmatpush.bf16.msra.mxu0 %v972
        %987 = vmatmul.bf16.gmra.mxu0 %v977
        %v988 = vpop.f32.mrf.mxu0
        %v989 = vadd.f32 %v962, %v988
        %v990 = vpop.f32.mrf.mxu0
        %991 = vdwg.mxu0
        %vm992 = vcmask 523264
        %v993 = vsel %vm992, %v989, 0.0
        %994 = vadd.xlane.f32.xlu0 %v993
        %v995 = vpop.xlane.xlu0 %994
        %v996 = vrcp.pop 64.0
        %v997 = vmul.f32 64.0, %v996
        %v998 = vsub.f32 1.0, %v997
        %v999 = vmul.f32 %v996, %v998
        %v1000 = vadd.f32 %v996, %v999
        %vm1001 = vweird.f32 %v996
        %v1002 = vsel %vm1001, %v996, %v1000
        %v1003 = vmul.f32 %v995, %v1002
        %v1004 = vsub.f32 %v989, %v1003
        %v1005 = vmul.f32 %v1004, %v1004
        %v1006 = vsel %vm992, %v1005, 0.0
        %1007 = vadd.xlane.f32.xlu0 %v1006
        %v1008 = vpop.xlane.xlu0 %1007
        %v1009 = vmul.f32 %v1008, %v1002
        %v1010 = vadd.f32 %v1009, 1e-05
        %v1011 = vrsqrt.pop %v1010
        %v1012 = vmul.f32 %v1011, %v1010
        %v1013 = vmul.f32 %v1012, %v1011
        %v1014 = vmul.f32 0.5, %v1013
        %v1015 = vsub.f32 1.5, %v1014
        %v1016 = vmul.f32 %v1011, %v1015
        %vm1017 = vweird.f32 %v1010
        %vm1018 = vweird.f32 %v1011
        %vm1019 = vmor %vm1017, %vm1018
        %v1020 = vsel %vm1019, %v1011, %v1016
        %v1021 = vmul.f32 %v1004, %v1020
        %v1023 = vperm.slane %v522, 0
        %v1025 = vmul.f32 %v1021, %v1023
        %v1027 = vperm.slane %v523, 0
        %v1029 = vadd.f32 %v1025, %v1027
        %v1030 = vpack.c.bf16 %v1029, %v1029
        %v1032 = vperm.slane %v532, 0
        %v1042 = vunpack.c.l.b16 %v524
        %v1043 = vunpack.c.l.b16 %v525
        %v1044 = vunpack.c.l.b16 %v526
        %v1045 = vunpack.c.l.b16 %v527
        %v1046 = vunpack.c.l.b16 %v528
        %v1047 = vunpack.c.l.b16 %v529
        %v1048 = vunpack.c.l.b16 %v530
        %v1049 = vunpack.c.l.b16 %v531
        %v1050 = vpack.c.b16 %v1043, %v1042
        %v1051 = vpack.c.b16 %v1045, %v1044
        %v1052 = vpack.c.b16 %v1047, %v1046
        %v1053 = vpack.c.b16 %v1049, %v1048
        %v1059 = vsel %vm992, %v1030, 0
        %1061 = vmatpush.bf16.msra.mxu0 0
        %1062 = vmatpush.bf16.msra.mxu0 0
        %1063 = vmatpush.bf16.msra.mxu0 0
        %1064 = vmatpush.bf16.msra.mxu0 0
        %1065 = vmatpush.bf16.msra.mxu0 %v1053
        %1066 = vmatpush.bf16.msra.mxu0 %v1052
        %1067 = vmatpush.bf16.msra.mxu0 %v1051
        %1068 = vmatpush.bf16.msra.mxu0 %v1050
        %1069 = vmatmul.bf16.gmra.mxu0 %v1059
        %v1070 = vpop.f32.mrf.mxu0
        %v1071 = vadd.f32 %v1032, %v1070
        %v1072 = vpop.f32.mrf.mxu0
        %1073 = vdwg.mxu0
        %v1074 = vadd.f32 %v959, %v1071
        %v1075 = vsel %vm551, %v1074, 0.0
        %1076 = vadd.xlane.f32.xlu0 %v1075
        %v1077 = vpop.xlane.xlu0 %1076
        %v1078 = vmul.f32 %v1077, %v932
        %v1079 = vsub.f32 %v1074, %v1078
        %v1080 = vmul.f32 %v1079, %v1079
        %v1081 = vsel %vm551, %v1080, 0.0
        %1082 = vadd.xlane.f32.xlu0 %v1081
        %v1083 = vpop.xlane.xlu0 %1082
        %v1084 = vmul.f32 %v1083, %v932
        %v1085 = vadd.f32 %v1084, 1e-05
        %v1086 = vrsqrt.pop %v1085
        %v1087 = vmul.f32 %v1086, %v1085
        %v1088 = vmul.f32 %v1087, %v1086
        %v1089 = vmul.f32 0.5, %v1088
        %v1090 = vsub.f32 1.5, %v1089
        %v1091 = vmul.f32 %v1086, %v1090
        %vm1092 = vweird.f32 %v1085
        %vm1093 = vweird.f32 %v1086
        %vm1094 = vmor %vm1092, %vm1093
        %v1095 = vsel %vm1094, %v1086, %v1091
        %v1096 = vmul.f32 %v1079, %v1095
        %v1098 = vperm.slane %v533, 0
        %v1100 = vmul.f32 %v1096, %v1098
        %v1102 = vperm.slane %v534, 0
        %v1104 = vadd.f32 %v1100, %v1102
        %1105 = vst.msk [vmem:[%s502] sm:$0xff] %vm551, %v1104
        %s1106 = sand.u32 %s358, 1
        %s1107 = scalar_lea.sflag [#allocation4], %s1106
        %s1108 = sand.u32 %s358, 1
        %s1109 = smul.addr %s1108, 8
        %s1110 = scalar_lea.vmem [#allocation5], %s1109
        // Predicated region
        $region85: #{tpu_custom_call.1} parent=79 // pred_check
          %p1111 = pneg %p368
        $region86: #{tpu_custom_call.1} parent=79 // pred_check_branch
          %1113 = sbr.rel (%p1111) target = $region88
        $region87: #{tpu_custom_call.1} parent=79 // pred_region
          %1115 = vsyncadd %s1107, 0
          %s1116 = smul.addr %s30, 8
          %s1117 = scalar_lea.hbm %s15, %s1116
          %s1119 = sshll.u32 %s1110, 4
          %s1120 = int_to_ptr.vmem [resolvable:$true] %s1119
          %s1121 = sshll.u32 %s1117, 4
          %s1122 = int_to_ptr.hbm [resolvable:$true] %s1121
          %1124 = dma.vmem_to_hbm [thread:$0]  %s1120, 128, %s1122, %s1107
        $region88: #{tpu_custom_call.1} parent=79 // pred_fallthru
          _
      $region80: #{tpu_custom_call.1} parent=5 // pred_fallthru
        _
      %p1125 = scmp.le.s32.totalorder 2, %s25
      // Predicated region
      $region89: #{tpu_custom_call.1} parent=5 // pred_check
        %p1126 = pneg %p1125
      $region90: #{tpu_custom_call.1} parent=5 // pred_check_branch
        %1128 = sbr.rel (%p1126) target = $region92
      $region91: #{tpu_custom_call.1} parent=5 // pred_region
        %s1129 = ssub.s32 %s25, 2
        // Predicated region
        $region93: #{tpu_custom_call.1} parent=91 // pred_check
          %p1130 = pneg %p374
        $region94: #{tpu_custom_call.1} parent=91 // pred_check_branch
          %1132 = sbr.rel (%p1130) target = $region96
        $region95: #{tpu_custom_call.1} parent=91 // pred_region
          %s1133 = sand.u32 %s359, 1
          %s1134 = scalar_lea.sflag [#allocation4], %s1133
          %s1135 = sand.u32 %s359, 1
          %s1136 = smul.addr %s1135, 8
          %s1137 = scalar_lea.vmem [#allocation5], %s1136
          %1139 = dma.done %s1134, 128
        $region96: #{tpu_custom_call.1} parent=91 // pred_fallthru
          _
      $region92: #{tpu_custom_call.1} parent=5 // pred_fallthru
        _
    $region6: #{tpu_custom_call.1} parent=1 // loop_footer
      %s29 = sadd.s32 1, %s25
    $region7: #{tpu_custom_call.1} parent=1 // loop_footer_branch
      %24 = sbr.rel target = $region3
    $region8: #{tpu_custom_call.1} parent=1 // loop_exit
      _
    %1140 = vsyncpa [#allocation3], 1
    %s1141 = scalar_lea.sflag [#allocation3], 1
    %1142 = vsyncpa %s1141, 1
    %1143 = vsyncpa [#allocation4], 1
    %s1144 = scalar_lea.sflag [#allocation4], 1
    %1145 = vsyncpa %s1144, 1

</llo_original>
